<compile_context>
chip_gen: v5e
topology: v5e:2x2
jax: 0.10.0
libtpu: 0.0.40
codegen_flags: <defaults>
</compile_context>

<pallas_src>
import functools
import math

import jax
import jax.numpy as jnp
from jax import lax
from jax.experimental import pallas as pl
from jax.experimental.pallas import tpu as pltpu

NUM_KERNELS = 32                       # MinibatchDiscrimination num_kernels
KERNEL_DIM = 16                        # MinibatchDiscrimination kernel_dim
MBD_DIM = NUM_KERNELS * KERNEL_DIM     # 512

FUSE_MAX_B = 64    # single fused kernel up to this batch (B*B*512*4 <= 8 MiB)
MBD_TQ = 128       # stage-2 query rows per grid step
MBD_TK = 32        # stage-2 key rows per inner chunk (temp = 128*32*512*4 = 8 MiB)


# ---------------------------------------------------------------------------
# Shared in-kernel helpers (traced inside the kernels on loaded arrays).
# ---------------------------------------------------------------------------
def _dense_feat(x, cond, w1, b1, w2, b2, wc1, bc1, wc2, bc2,
                wj1h, wj1c, bj1, wj2, bj2):
    # main branch: bf16 operands on the MXU, f32 accumulation
    h = jnp.dot(x, w1, preferred_element_type=jnp.float32)
    h = jnp.maximum(h + b1, 0.0)
    h = jnp.dot(h.astype(jnp.bfloat16), w2, preferred_element_type=jnp.float32)
    h = jnp.maximum(h + b2, 0.0)                                   # (TB, 128)
    # condition branch (tiny, kept f32)
    c = jnp.maximum(jnp.dot(cond, wc1, preferred_element_type=jnp.float32) + bc1, 0.0)
    c = jnp.maximum(jnp.dot(c, wc2, preferred_element_type=jnp.float32) + bc2, 0.0)
    # joint: cat([h, c], -1) @ Wj1 == h @ Wj1[:128] + c @ Wj1[128:]
    j = (jnp.dot(h, wj1h, preferred_element_type=jnp.float32)
         + jnp.dot(c, wj1c, preferred_element_type=jnp.float32) + bj1)
    j = jnp.maximum(j, 0.0)
    feat = jnp.dot(j, wj2, preferred_element_type=jnp.float32) + bj2
    return jnp.maximum(feat, 0.0)                                  # (TB, 32)


def _mbd_exp_block(mq, mk, sel):
    """exp(-L1_per_kernel) between query rows mq (TQ, 512) and key rows mk (TK, 512)."""
    tq, tk = mq.shape[0], mk.shape[0]
    diff = jnp.abs(mq[:, None, :] - mk[None, :, :]).reshape(tq * tk, MBD_DIM)
    # per-kernel L1 group-sum via block-diagonal selector matmul (MXU)
    l1 = jnp.dot(diff, sel, preferred_element_type=jnp.float32)     # (tq*tk, 32)
    return jnp.exp(-l1).reshape(tq, tk, NUM_KERNELS)


# ---------------------------------------------------------------------------
# Kernels
# ---------------------------------------------------------------------------
def fused_kernel(x_ref, cond_ref,
                 w1_ref, b1_ref, w2_ref, b2_ref,
                 wc1_ref, bc1_ref, wc2_ref, bc2_ref,
                 wj1h_ref, wj1c_ref, bj1_ref, wj2_ref, bj2_ref, t_ref,
                 sel_ref, wff_ref, wfm_ref, bf_ref,
                 out_ref):
    feat = _dense_feat(x_ref[...], cond_ref[...],
                       w1_ref[...], b1_ref[...], w2_ref[...], b2_ref[...],
                       wc1_ref[...], bc1_ref[...], wc2_ref[...], bc2_ref[...],
                       wj1h_ref[...], wj1c_ref[...], bj1_ref[...],
                       wj2_ref[...], bj2_ref[...])
    m = jnp.dot(feat, t_ref[...], preferred_element_type=jnp.float32)  # (B, 512)
    mbd = jnp.sum(_mbd_exp_block(m, m, sel_ref[...]), axis=1) - 1.0    # (B, 32)
    out_ref[...] = (jnp.sum(feat * wff_ref[...] + mbd * wfm_ref[...],
                            axis=-1, keepdims=True) + bf_ref[...])


def features_kernel(x_ref, cond_ref,
                    w1_ref, b1_ref, w2_ref, b2_ref,
                    wc1_ref, bc1_ref, wc2_ref, bc2_ref,
                    wj1h_ref, wj1c_ref, bj1_ref, wj2_ref, bj2_ref, t_ref,
                    feat_ref, m_ref):
    feat = _dense_feat(x_ref[...], cond_ref[...],
                       w1_ref[...], b1_ref[...], w2_ref[...], b2_ref[...],
                       wc1_ref[...], bc1_ref[...], wc2_ref[...], bc2_ref[...],
                       wj1h_ref[...], wj1c_ref[...], bj1_ref[...],
                       wj2_ref[...], bj2_ref[...])
    feat_ref[...] = feat
    # lane-dense 512-wide store; reused by stage 2 (no recompute)
    m_ref[...] = jnp.dot(feat, t_ref[...], preferred_element_type=jnp.float32)


def mbd_final_kernel(mq_ref, feat_ref, mall_ref, sel_ref, wff_ref, wfm_ref,
                     bf_ref, out_ref, *, valid_b):
    mq = mq_ref[...]                                   # (TQ, 512) query rows
    sel = sel_ref[...]
    tq = mq.shape[0]
    n_chunks = mall_ref.shape[0] // MBD_TK             # static: padded B / TK

    def body(kc, acc):
        start = pl.multiple_of(kc * MBD_TK, MBD_TK)
        mk = mall_ref[pl.ds(start, MBD_TK), :]                       # (TK, 512)
        k = _mbd_exp_block(mq, mk, sel)                              # (TQ, TK, 32)
        key_idx = start + lax.broadcasted_iota(jnp.int32, (1, MBD_TK, 1), 1)
        k = jnp.where(key_idx < valid_b, k, 0.0)       # mask padded key rows
        return acc + jnp.sum(k, axis=1)

    mbd = lax.fori_loop(0, n_chunks, body,
                        jnp.zeros((tq, NUM_KERNELS), jnp.float32)) - 1.0
    # final: cat([feat, mbd], -1) @ Wf + bf, fused into one reduce
    out_ref[...] = (jnp.sum(feat_ref[...] * wff_ref[...] + mbd * wfm_ref[...],
                            axis=-1, keepdims=True) + bf_ref[...])


# ---------------------------------------------------------------------------
# Wrapper
# ---------------------------------------------------------------------------
def discriminator_forward(x, cond, kparams, *, fuse_max_b=FUSE_MAX_B):
    (w1, b1, w2, b2, wc1, bc1, wc2, bc2,
     wj1h, wj1c, bj1, wj2, bj2, T, sel, wff, wfm, bf) = kparams

    B = x.shape[0]
    # bf16 activations: halves x DMA bytes for the mem-bound first matmul
    x2d = x.reshape(B, -1).astype(jnp.bfloat16)
    cond2d = cond.reshape(B, -1).astype(jnp.float32)
    in_feats = x2d.shape[1]
    cond_feats = cond2d.shape[1]

    weights = (w1, b1, w2, b2, wc1, bc1, wc2, bc2,
               wj1h, wj1c, bj1, wj2, bj2, T)

    # ---------------- small batch: single fused launch ----------------
    if B <= fuse_max_b:
        vmem = pl.BlockSpec(memory_space=pltpu.MemorySpace.VMEM)
        return pl.pallas_call(
            fused_kernel,
            out_shape=jax.ShapeDtypeStruct((B, 1), jnp.float32),
            in_specs=[vmem] * (2 + len(weights) + 4),
            out_specs=vmem,
        )(x2d, cond2d, *weights, sel, wff, wfm, bf)

    # ---------------- stage 1: batch-tiled dense features ----------------
    if B <= 256:
        tile_b = B
    else:
        half = -(-B // 2)                               # ceil(B/2)
        tile_b = min(512, ((half + 15) // 16) * 16)     # >=2 grid steps (v7x 2 TCs)
    grid1 = (pl.cdiv(B, tile_b),)

    def const2d(arr):
        # full-array block, same block every step -> VMEM-resident weight
        return pl.BlockSpec(arr.shape, lambda i: (0, 0))

    feat, M = pl.pallas_call(
        features_kernel,
        out_shape=(jax.ShapeDtypeStruct((B, NUM_KERNELS), jnp.float32),
                   jax.ShapeDtypeStruct((B, MBD_DIM), jnp.float32)),
        grid=grid1,
        in_specs=[pl.BlockSpec((tile_b, in_feats), lambda i: (i, 0)),
                  pl.BlockSpec((tile_b, cond_feats), lambda i: (i, 0))]
                 + [const2d(w) for w in weights],
        out_specs=(pl.BlockSpec((tile_b, NUM_KERNELS), lambda i: (i, 0)),
                   pl.BlockSpec((tile_b, MBD_DIM), lambda i: (i, 0))),
        compiler_params=pltpu.CompilerParams(dimension_semantics=("parallel",)),
    )(x2d, cond2d, *weights)

    # ---------------- stage 2: MBD + final, row-tiled over queries ----------------
    b_pad = pl.cdiv(B, MBD_TQ) * MBD_TQ
    m_pad = jnp.pad(M, ((0, b_pad - B), (0, 0)))        # padded keys masked in-kernel
    grid2 = (b_pad // MBD_TQ,)

    kernel2 = functools.partial(mbd_final_kernel, valid_b=B)
    return pl.pallas_call(
        kernel2,
        out_shape=jax.ShapeDtypeStruct((B, 1), jnp.float32),
        grid=grid2,
        in_specs=[pl.BlockSpec((MBD_TQ, MBD_DIM), lambda i: (i, 0)),      # query M rows
                  pl.BlockSpec((MBD_TQ, NUM_KERNELS), lambda i: (i, 0)),  # query feat rows
                  const2d(m_pad),                                         # all key rows
                  const2d(sel), const2d(wff), const2d(wfm), const2d(bf)],
        out_specs=pl.BlockSpec((MBD_TQ, 1), lambda i: (i, 0)),
        compiler_params=pltpu.CompilerParams(dimension_semantics=("parallel",)),
    )(m_pad, feat, m_pad, sel, wff, wfm, bf)


# ---------------------------------------------------------------------------
# Parameters & pure-JAX reference
# ---------------------------------------------------------------------------
def make_params(key, in_features, cond_features, layer_sizes=(256, 128)):
    def xavier(k, shape):
        limit = math.sqrt(6.0 / (shape[0] + shape[1]))
        return jax.random.uniform(k, shape, jnp.float32, -limit, limit)

    ks = jax.random.split(key, 16)
    l1, l2 = layer_sizes
    p = {}
    p["w1"], p["b1"] = xavier(ks[0], (in_features, l1)), 0.01 * jax.random.normal(ks[1], (1, l1), jnp.float32)
    p["w2"], p["b2"] = xavier(ks[2], (l1, l2)), 0.01 * jax.random.normal(ks[3], (1, l2), jnp.float32)
    p["wc1"], p["bc1"] = xavier(ks[4], (cond_features, 64)), 0.01 * jax.random.normal(ks[5], (1, 64), jnp.float32)
    p["wc2"], p["bc2"] = xavier(ks[6], (64, 32)), 0.01 * jax.random.normal(ks[7], (1, 32), jnp.float32)
    p["wj1"], p["bj1"] = xavier(ks[8], (l2 + 32, 64)), 0.01 * jax.random.normal(ks[9], (1, 64), jnp.float32)
    p["wj2"], p["bj2"] = xavier(ks[10], (64, 32)), 0.01 * jax.random.normal(ks[11], (1, 32), jnp.float32)
    p["T"] = xavier(ks[12], (32, MBD_DIM))
    p["wf"], p["bf"] = xavier(ks[13], (32 + NUM_KERNELS, 1)), 0.01 * jax.random.normal(ks[14], (1, 1), jnp.float32)
    return p


def prepare_kernel_params(p, layer_sizes=(256, 128)):
    """One-time conversion (outside the forward): bf16 big weights, split concats."""
    l2 = layer_sizes[-1]
    wj1h, wj1c = p["wj1"][:l2, :], p["wj1"][l2:, :]
    wff = p["wf"][:32, :].T            # (1, 32) multiplies feat
    wfm = p["wf"][32:, :].T            # (1, 32) multiplies mbd features
    sel = (jnp.arange(MBD_DIM)[:, None] // KERNEL_DIM
           == jnp.arange(NUM_KERNELS)[None, :]).astype(jnp.float32)
    return (p["w1"].astype(jnp.bfloat16), p["b1"],
            p["w2"].astype(jnp.bfloat16), p["b2"],
            p["wc1"], p["bc1"], p["wc2"], p["bc2"],
            wj1h, wj1c, p["bj1"], p["wj2"], p["bj2"],
            p["T"], sel, wff, wfm, p["bf"])


def reference_forward(x, cond, p, *, bf16_main=False):
    """Pure-JAX mirror of the torch forward.  bf16_main=True replicates the
    kernel's mixed precision on the main branch (for tight structural checks)."""
    B = x.shape[0]
    xf = x.reshape(B, -1).astype(jnp.float32)
    cf = cond.reshape(B, -1).astype(jnp.float32)
    if bf16_main:
        h = jnp.dot(xf.astype(jnp.bfloat16), p["w1"].astype(jnp.bfloat16),
                    preferred_element_type=jnp.float32)
        h = jnp.maximum(h + p["b1"], 0.0)
        h = jnp.dot(h.astype(jnp.bfloat16), p["w2"].astype(jnp.bfloat16),
                    preferred_element_type=jnp.float32)
        h = jnp.maximum(h + p["b2"], 0.0)
    else:
        h = jnp.maximum(xf @ p["w1"] + p["b1"], 0.0)
        h = jnp.maximum(h @ p["w2"] + p["b2"], 0.0)
    c = jnp.maximum(cf @ p["wc1"] + p["bc1"], 0.0)
    c = jnp.maximum(c @ p["wc2"] + p["bc2"], 0.0)
    hc = jnp.concatenate([h, c], axis=-1)
    j = jnp.maximum(hc @ p["wj1"] + p["bj1"], 0.0)
    feat = jnp.maximum(j @ p["wj2"] + p["bj2"], 0.0)
    M = (feat @ p["T"]).reshape(B, NUM_KERNELS, KERNEL_DIM)
    l1 = jnp.abs(M[None, :, :, :] - M[:, None, :, :]).sum(axis=3)
    mbd = jnp.exp(-l1).sum(axis=1) - 1.0
    enh = jnp.concatenate([feat, mbd], axis=-1)
    return enh @ p["wf"] + p["bf"]


if __name__ == "__main__":
    key = jax.random.PRNGKey(0)
    k_x1, k_c1, k_p, k_x2, k_c2 = jax.random.split(key, 5)

    input_shape = (4, 16, 16)          # -> 1024 flattened features
    cond_features = 8
    layer_sizes = (256, 128)
    in_features = math.prod(input_shape)

    p = make_params(k_p, in_features, cond_features, layer_sizes)
    kparams = prepare_kernel_params(p, layer_sizes)   # bf16 casts hoisted, done once

    # ---- small batch: fused single-launch path ----
    B1 = 8
    x1 = jax.random.normal(k_x1, (B1,) + input_shape, jnp.float32)
    c1 = jax.random.normal(k_c1, (B1, cond_features), jnp.float32)
    out1 = jax.block_until_ready(discriminator_forward(x1, c1, kparams))
    assert out1.shape == (B1, 1)
    ref1 = reference_forward(x1, c1, p)                          # full f32 semantics
    assert jnp.allclose(out1, ref1, rtol=2e-2, atol=2e-2), (out1, ref1)
    ref1q = reference_forward(x1, c1, p, bf16_main=True)         # matched precision
    assert jnp.allclose(out1, ref1q, rtol=5e-3, atol=5e-3), (out1, ref1q)

    # ---- larger batch (not a multiple of the MBD tiles): two-stage tiled path ----
    B2 = 160
    x2 = jax.random.normal(k_x2, (B2,) + input_shape, jnp.float32)
    c2 = jax.random.normal(k_c2, (B2, cond_features), jnp.float32)
    out2 = jax.block_until_ready(
        discriminator_forward(x2, c2, kparams, fuse_max_b=0))    # force tiled path
    assert out2.shape == (B2, 1)
    ref2q = reference_forward(x2, c2, p, bf16_main=True)
    assert jnp.allclose(out2, ref2q, rtol=5e-3, atol=5e-3), (out2, ref2q)

    print("KERNEL_OK")
</pallas_src>

<mosaic_0001>
module attributes {stable_mosaic.version = 11 : i64} {
  func.func @fused_kernel(%arg0: memref<8x1024xbf16, #tpu.memory_space<vmem>>, %arg1: memref<8x8xf32, #tpu.memory_space<vmem>>, %arg2: memref<1024x256xbf16, #tpu.memory_space<vmem>>, %arg3: memref<1x256xf32, #tpu.memory_space<vmem>>, %arg4: memref<256x128xbf16, #tpu.memory_space<vmem>>, %arg5: memref<1x128xf32, #tpu.memory_space<vmem>>, %arg6: memref<8x64xf32, #tpu.memory_space<vmem>>, %arg7: memref<1x64xf32, #tpu.memory_space<vmem>>, %arg8: memref<64x32xf32, #tpu.memory_space<vmem>>, %arg9: memref<1x32xf32, #tpu.memory_space<vmem>>, %arg10: memref<128x64xf32, #tpu.memory_space<vmem>>, %arg11: memref<32x64xf32, #tpu.memory_space<vmem>>, %arg12: memref<1x64xf32, #tpu.memory_space<vmem>>, %arg13: memref<64x32xf32, #tpu.memory_space<vmem>>, %arg14: memref<1x32xf32, #tpu.memory_space<vmem>>, %arg15: memref<32x512xf32, #tpu.memory_space<vmem>>, %arg16: memref<512x32xf32, #tpu.memory_space<vmem>>, %arg17: memref<1x32xf32, #tpu.memory_space<vmem>>, %arg18: memref<1x32xf32, #tpu.memory_space<vmem>>, %arg19: memref<1x1xf32, #tpu.memory_space<vmem>>, %arg20: memref<8x1xf32, #tpu.memory_space<vmem>>) attributes {dimension_semantics = [], scalar_prefetch = 0 : i64, scratch_operands = 0 : i64, tpu.core_type = #tpu.core_type<tc>} {
    %c0 = arith.constant 0 : index
    %c0_0 = arith.constant 0 : index
    %0 = vector.load %arg0[%c0, %c0_0] : memref<8x1024xbf16, #tpu.memory_space<vmem>>, vector<8x1024xbf16>
    %c0_1 = arith.constant 0 : index
    %c0_2 = arith.constant 0 : index
    %1 = vector.load %arg1[%c0_1, %c0_2] : memref<8x8xf32, #tpu.memory_space<vmem>>, vector<8x8xf32>
    %c0_3 = arith.constant 0 : index
    %c0_4 = arith.constant 0 : index
    %2 = vector.load %arg2[%c0_3, %c0_4] : memref<1024x256xbf16, #tpu.memory_space<vmem>>, vector<1024x256xbf16>
    %c0_5 = arith.constant 0 : index
    %c0_6 = arith.constant 0 : index
    %3 = vector.load %arg3[%c0_5, %c0_6] : memref<1x256xf32, #tpu.memory_space<vmem>>, vector<1x256xf32>
    %c0_7 = arith.constant 0 : index
    %c0_8 = arith.constant 0 : index
    %4 = vector.load %arg4[%c0_7, %c0_8] : memref<256x128xbf16, #tpu.memory_space<vmem>>, vector<256x128xbf16>
    %c0_9 = arith.constant 0 : index
    %c0_10 = arith.constant 0 : index
    %5 = vector.load %arg5[%c0_9, %c0_10] : memref<1x128xf32, #tpu.memory_space<vmem>>, vector<1x128xf32>
    %c0_11 = arith.constant 0 : index
    %c0_12 = arith.constant 0 : index
    %6 = vector.load %arg6[%c0_11, %c0_12] : memref<8x64xf32, #tpu.memory_space<vmem>>, vector<8x64xf32>
    %c0_13 = arith.constant 0 : index
    %c0_14 = arith.constant 0 : index
    %7 = vector.load %arg7[%c0_13, %c0_14] : memref<1x64xf32, #tpu.memory_space<vmem>>, vector<1x64xf32>
    %c0_15 = arith.constant 0 : index
    %c0_16 = arith.constant 0 : index
    %8 = vector.load %arg8[%c0_15, %c0_16] : memref<64x32xf32, #tpu.memory_space<vmem>>, vector<64x32xf32>
    %c0_17 = arith.constant 0 : index
    %c0_18 = arith.constant 0 : index
    %9 = vector.load %arg9[%c0_17, %c0_18] : memref<1x32xf32, #tpu.memory_space<vmem>>, vector<1x32xf32>
    %c0_19 = arith.constant 0 : index
    %c0_20 = arith.constant 0 : index
    %10 = vector.load %arg10[%c0_19, %c0_20] : memref<128x64xf32, #tpu.memory_space<vmem>>, vector<128x64xf32>
    %c0_21 = arith.constant 0 : index
    %c0_22 = arith.constant 0 : index
    %11 = vector.load %arg11[%c0_21, %c0_22] : memref<32x64xf32, #tpu.memory_space<vmem>>, vector<32x64xf32>
    %c0_23 = arith.constant 0 : index
    %c0_24 = arith.constant 0 : index
    %12 = vector.load %arg12[%c0_23, %c0_24] : memref<1x64xf32, #tpu.memory_space<vmem>>, vector<1x64xf32>
    %c0_25 = arith.constant 0 : index
    %c0_26 = arith.constant 0 : index
    %13 = vector.load %arg13[%c0_25, %c0_26] : memref<64x32xf32, #tpu.memory_space<vmem>>, vector<64x32xf32>
    %c0_27 = arith.constant 0 : index
    %c0_28 = arith.constant 0 : index
    %14 = vector.load %arg14[%c0_27, %c0_28] : memref<1x32xf32, #tpu.memory_space<vmem>>, vector<1x32xf32>
    %cst = arith.constant dense<0.000000e+00> : vector<8x256xf32>
    %15 = tpu.matmul %0, %2, %cst {dimension_numbers = #tpu.dot_dimension_numbers<[1], [0], [0], [1], [0, 0, 1, 1], [], []>} : vector<8x1024xbf16>, vector<1024x256xbf16>, vector<8x256xf32> -> vector<8x256xf32>
    %16 = vector.broadcast %3 : vector<1x256xf32> to vector<8x256xf32>
    %17 = arith.addf %15, %16 : vector<8x256xf32>
    %cst_29 = arith.constant 0.000000e+00 : f32
    %18 = vector.broadcast %cst_29 : f32 to vector<8x256xf32>
    %19 = arith.maximumf %17, %18 : vector<8x256xf32>
    %20 = arith.truncf %19 : vector<8x256xf32> to vector<8x256xbf16>
    %cst_30 = arith.constant dense<0.000000e+00> : vector<8x128xf32>
    %21 = tpu.matmul %20, %4, %cst_30 {dimension_numbers = #tpu.dot_dimension_numbers<[1], [0], [0], [1], [0, 0, 1, 1], [], []>} : vector<8x256xbf16>, vector<256x128xbf16>, vector<8x128xf32> -> vector<8x128xf32>
    %22 = vector.broadcast %5 : vector<1x128xf32> to vector<8x128xf32>
    %23 = arith.addf %21, %22 : vector<8x128xf32>
    %cst_31 = arith.constant 0.000000e+00 : f32
    %24 = vector.broadcast %cst_31 : f32 to vector<8x128xf32>
    %25 = arith.maximumf %23, %24 : vector<8x128xf32>
    %cst_32 = arith.constant dense<0.000000e+00> : vector<8x64xf32>
    %26 = tpu.matmul %1, %6, %cst_32 {dimension_numbers = #tpu.dot_dimension_numbers<[1], [0], [0], [1], [0, 0, 1, 1], [], []>} : vector<8x8xf32>, vector<8x64xf32>, vector<8x64xf32> -> vector<8x64xf32>
    %27 = vector.broadcast %7 : vector<1x64xf32> to vector<8x64xf32>
    %28 = arith.addf %26, %27 : vector<8x64xf32>
    %cst_33 = arith.constant 0.000000e+00 : f32
    %29 = vector.broadcast %cst_33 : f32 to vector<8x64xf32>
    %30 = arith.maximumf %28, %29 : vector<8x64xf32>
    %cst_34 = arith.constant dense<0.000000e+00> : vector<8x32xf32>
    %31 = tpu.matmul %30, %8, %cst_34 {dimension_numbers = #tpu.dot_dimension_numbers<[1], [0], [0], [1], [0, 0, 1, 1], [], []>} : vector<8x64xf32>, vector<64x32xf32>, vector<8x32xf32> -> vector<8x32xf32>
    %32 = vector.broadcast %9 : vector<1x32xf32> to vector<8x32xf32>
    %33 = arith.addf %31, %32 : vector<8x32xf32>
    %cst_35 = arith.constant 0.000000e+00 : f32
    %34 = vector.broadcast %cst_35 : f32 to vector<8x32xf32>
    %35 = arith.maximumf %33, %34 : vector<8x32xf32>
    %cst_36 = arith.constant dense<0.000000e+00> : vector<8x64xf32>
    %36 = tpu.matmul %25, %10, %cst_36 {dimension_numbers = #tpu.dot_dimension_numbers<[1], [0], [0], [1], [0, 0, 1, 1], [], []>} : vector<8x128xf32>, vector<128x64xf32>, vector<8x64xf32> -> vector<8x64xf32>
    %cst_37 = arith.constant dense<0.000000e+00> : vector<8x64xf32>
    %37 = tpu.matmul %35, %11, %cst_37 {dimension_numbers = #tpu.dot_dimension_numbers<[1], [0], [0], [1], [0, 0, 1, 1], [], []>} : vector<8x32xf32>, vector<32x64xf32>, vector<8x64xf32> -> vector<8x64xf32>
    %38 = arith.addf %36, %37 : vector<8x64xf32>
    %39 = vector.broadcast %12 : vector<1x64xf32> to vector<8x64xf32>
    %40 = arith.addf %38, %39 : vector<8x64xf32>
    %cst_38 = arith.constant 0.000000e+00 : f32
    %41 = vector.broadcast %cst_38 : f32 to vector<8x64xf32>
    %42 = arith.maximumf %40, %41 : vector<8x64xf32>
    %cst_39 = arith.constant dense<0.000000e+00> : vector<8x32xf32>
    %43 = tpu.matmul %42, %13, %cst_39 {dimension_numbers = #tpu.dot_dimension_numbers<[1], [0], [0], [1], [0, 0, 1, 1], [], []>} : vector<8x64xf32>, vector<64x32xf32>, vector<8x32xf32> -> vector<8x32xf32>
    %44 = vector.broadcast %14 : vector<1x32xf32> to vector<8x32xf32>
    %45 = arith.addf %43, %44 : vector<8x32xf32>
    %cst_40 = arith.constant 0.000000e+00 : f32
    %46 = vector.broadcast %cst_40 : f32 to vector<8x32xf32>
    %47 = arith.maximumf %45, %46 : vector<8x32xf32>
    %c0_41 = arith.constant 0 : index
    %c0_42 = arith.constant 0 : index
    %48 = vector.load %arg15[%c0_41, %c0_42] : memref<32x512xf32, #tpu.memory_space<vmem>>, vector<32x512xf32>
    %cst_43 = arith.constant dense<0.000000e+00> : vector<8x512xf32>
    %49 = tpu.matmul %47, %48, %cst_43 {dimension_numbers = #tpu.dot_dimension_numbers<[1], [0], [0], [1], [0, 0, 1, 1], [], []>} : vector<8x32xf32>, vector<32x512xf32>, vector<8x512xf32> -> vector<8x512xf32>
    %c0_44 = arith.constant 0 : index
    %c0_45 = arith.constant 0 : index
    %50 = vector.load %arg16[%c0_44, %c0_45] : memref<512x32xf32, #tpu.memory_space<vmem>>, vector<512x32xf32>
    %51 = vector.shape_cast %49 : vector<8x512xf32> to vector<8x1x512xf32>
    %52 = vector.shape_cast %49 : vector<8x512xf32> to vector<1x8x512xf32>
    %53 = vector.broadcast %51 : vector<8x1x512xf32> to vector<8x8x512xf32>
    %54 = vector.broadcast %52 : vector<1x8x512xf32> to vector<8x8x512xf32>
    %55 = arith.subf %53, %54 : vector<8x8x512xf32>
    %56 = math.absf %55 : vector<8x8x512xf32>
    %57 = vector.shape_cast %56 : vector<8x8x512xf32> to vector<64x512xf32>
    %cst_46 = arith.constant dense<0.000000e+00> : vector<64x32xf32>
    %58 = tpu.matmul %57, %50, %cst_46 {dimension_numbers = #tpu.dot_dimension_numbers<[1], [0], [0], [1], [0, 0, 1, 1], [], []>} : vector<64x512xf32>, vector<512x32xf32>, vector<64x32xf32> -> vector<64x32xf32>
    %cst_47 = arith.constant 0.000000e+00 : f32
    %59 = vector.broadcast %cst_47 : f32 to vector<64x32xf32>
    %60 = arith.subf %59, %58 : vector<64x32xf32>
    %61 = math.exp %60 : vector<64x32xf32>
    %62 = vector.shape_cast %61 : vector<64x32xf32> to vector<8x8x32xf32>
    %cst_48 = arith.constant dense<0.000000e+00> : vector<8x32xf32>
    %63 = vector.multi_reduction <add>, %62, %cst_48 [1] : vector<8x8x32xf32> to vector<8x32xf32>
    %cst_49 = arith.constant 1.000000e+00 : f32
    %64 = vector.broadcast %cst_49 : f32 to vector<8x32xf32>
    %65 = arith.subf %63, %64 : vector<8x32xf32>
    %c0_50 = arith.constant 0 : index
    %c0_51 = arith.constant 0 : index
    %66 = vector.load %arg17[%c0_50, %c0_51] : memref<1x32xf32, #tpu.memory_space<vmem>>, vector<1x32xf32>
    %67 = vector.broadcast %66 : vector<1x32xf32> to vector<8x32xf32>
    %68 = arith.mulf %47, %67 : vector<8x32xf32>
    %c0_52 = arith.constant 0 : index
    %c0_53 = arith.constant 0 : index
    %69 = vector.load %arg18[%c0_52, %c0_53] : memref<1x32xf32, #tpu.memory_space<vmem>>, vector<1x32xf32>
    %70 = vector.broadcast %69 : vector<1x32xf32> to vector<8x32xf32>
    %71 = arith.mulf %65, %70 : vector<8x32xf32>
    %72 = arith.addf %68, %71 : vector<8x32xf32>
    %cst_54 = arith.constant dense<0.000000e+00> : vector<8xf32>
    %73 = vector.multi_reduction <add>, %72, %cst_54 [1] : vector<8x32xf32> to vector<8xf32>
    %74 = vector.shape_cast %73 : vector<8xf32> to vector<8x1xf32>
    %c0_55 = arith.constant 0 : index
    %c0_56 = arith.constant 0 : index
    %75 = vector.load %arg19[%c0_55, %c0_56] : memref<1x1xf32, #tpu.memory_space<vmem>>, vector<1x1xf32>
    %76 = vector.broadcast %75 : vector<1x1xf32> to vector<8x1xf32>
    %77 = arith.addf %74, %76 : vector<8x1xf32>
    %c0_57 = arith.constant 0 : index
    %c0_58 = arith.constant 0 : index
    %78 = vector.load %arg20[%c0_57, %c0_58] : memref<8x1xf32, #tpu.memory_space<vmem>>, vector<8x1xf32>
    tpu.vector_store %arg20[%c0_57, %c0_58], %77 {strides = array<i32>} : memref<8x1xf32, #tpu.memory_space<vmem>>, vector<8x1xf32>,
    return
  }
}

</mosaic_0001>

<llo_original>
// kernel: tpu_custom_call.1
$region0: #{tpu_custom_call.1}
  #allocation0 [shape = 'u32[]', space=smem, size = 0x4, offset = 0x4, fixed_abs, tag = 'smem constant byte address 0x4 - core index']
  #allocation1 [shape = 'u32[72,128]{1,0:T(1,128)}', space=vmem, size = 0x9000, scoped, tag = 'internal scratch']
  #allocation2 [shape = 'f32[1,1]{1,0:T(1,128)S(1)}', space=vmem, size = 0x200, scoped, tag = 'scoped memory for tpu_custom_call.1']
  %s0 = inlined_call_operand.vmem [shape: bf16[8,1024], index: 0, kind: input, shape index: {}]
  %s1 = inlined_call_operand.vmem [shape: f32[8,8], index: 1, kind: input, shape index: {}]
  %s2 = inlined_call_operand.hbm [shape: bf16[1024,256], index: 2, kind: input, shape index: {}]
  %s3 = inlined_call_operand.vmem [shape: f32[1,256], index: 3, kind: input, shape index: {}]
  %s4 = inlined_call_operand.vmem [shape: bf16[256,128], index: 4, kind: input, shape index: {}]
  %s5 = inlined_call_operand.vmem [shape: f32[1,128], index: 5, kind: input, shape index: {}]
  %s6 = inlined_call_operand.vmem [shape: f32[8,64], index: 6, kind: input, shape index: {}]
  %s7 = inlined_call_operand.vmem [shape: f32[1,64], index: 7, kind: input, shape index: {}]
  %s8 = inlined_call_operand.vmem [shape: f32[64,32], index: 8, kind: input, shape index: {}]
  %s9 = inlined_call_operand.vmem [shape: f32[1,32], index: 9, kind: input, shape index: {}]
  %s10 = inlined_call_operand.vmem [shape: f32[128,64], index: 10, kind: input, shape index: {}]
  %s11 = inlined_call_operand.vmem [shape: f32[32,64], index: 11, kind: input, shape index: {}]
  %s12 = inlined_call_operand.vmem [shape: f32[1,64], index: 12, kind: input, shape index: {}]
  %s13 = inlined_call_operand.vmem [shape: f32[64,32], index: 13, kind: input, shape index: {}]
  %s14 = inlined_call_operand.vmem [shape: f32[1,32], index: 14, kind: input, shape index: {}]
  %s15 = inlined_call_operand.vmem [shape: f32[32,512], index: 15, kind: input, shape index: {}]
  %s16 = inlined_call_operand.vmem [shape: f32[512,32], index: 16, kind: input, shape index: {}]
  %s17 = inlined_call_operand.vmem [shape: f32[1,32], index: 17, kind: input, shape index: {}]
  %s18 = inlined_call_operand.vmem [shape: f32[1,32], index: 18, kind: input, shape index: {}]
  %s19 = inlined_call_operand.<no memory space> [shape: f32[1,1], index: 19, kind: input, shape index: {}]
  %s20 = inlined_call_operand.vmem [shape: f32[8,1], index: 20, kind: output, shape index: {}]
  %s21 = sld [smem:[#allocation0]]
  $region94: #{tpu_custom_call.1} parent=0
    _
  %s23 = ssub.s32 1, %s21
  %s24 = scalar_select 0, %s23, %s21
  %v25 = vstv %s19
  %26 = vst [vmem:[#allocation2] sm:$0x1] %v25
  $region1: #{tpu_custom_call.1} parent=0
    #allocation3 [shape = 'u8[524288]{0}', space=vmem, size = 0x80000, scoped, tag = 'input window, operand 2, single buffered']
    #allocation4 [shape = 's32[1]{0}', space=sflag, size = 0x4, scoped, tag = 'scoped memory for tpu_custom_call.1']
    %27 = vsyncpa [#allocation4], 0
    // Predicated region
    $region2: #{tpu_custom_call.1} parent=1 // pred_check
      _
    $region3: #{tpu_custom_call.1} parent=1 // pred_check_branch
      %29 = sbr.rel (0) target = $region5
    $region4: #{tpu_custom_call.1} parent=1 // pred_region
      _
    $region5: #{tpu_custom_call.1} parent=1 // pred_fallthru
      _
    // Predicated region
    $region6: #{tpu_custom_call.1} parent=1 // pred_check
      _
    $region7: #{tpu_custom_call.1} parent=1 // pred_check_branch
      %31 = sbr.rel (0) target = $region9
    $region8: #{tpu_custom_call.1} parent=1 // pred_region
      _
    $region9: #{tpu_custom_call.1} parent=1 // pred_fallthru
      _
    // Predicated region
    $region10: #{tpu_custom_call.1} parent=1 // pred_check
      _
    $region11: #{tpu_custom_call.1} parent=1 // pred_check_branch
      %33 = sbr.rel (0) target = $region13
    $region12: #{tpu_custom_call.1} parent=1 // pred_region
      %35 = vsyncadd [#allocation4], 0
      %s36 = sshll.u32 %s2, 4
      %s37 = int_to_ptr.hbm [resolvable:$true] %s36
      %s38 = sshll.u32 [#allocation3], 4
      %s39 = int_to_ptr.vmem [resolvable:$true] %s38
      %44 = dma.hbm_to_vmem [thread:$0]  %s37, 16384, %s39, [#allocation4], 128, 128, 8
    $region13: #{tpu_custom_call.1} parent=1 // pred_fallthru
      _
    // Predicated region
    $region14: #{tpu_custom_call.1} parent=1 // pred_check
      _
    $region15: #{tpu_custom_call.1} parent=1 // pred_check_branch
      %46 = sbr.rel (0) target = $region17
    $region16: #{tpu_custom_call.1} parent=1 // pred_region
      _
    $region17: #{tpu_custom_call.1} parent=1 // pred_fallthru
      _
    // Predicated region
    $region18: #{tpu_custom_call.1} parent=1 // pred_check
      _
    $region19: #{tpu_custom_call.1} parent=1 // pred_check_branch
      %48 = sbr.rel (0) target = $region21
    $region20: #{tpu_custom_call.1} parent=1 // pred_region
      _
    $region21: #{tpu_custom_call.1} parent=1 // pred_fallthru
      _
    // Predicated region
    $region22: #{tpu_custom_call.1} parent=1 // pred_check
      _
    $region23: #{tpu_custom_call.1} parent=1 // pred_check_branch
      %50 = sbr.rel (0) target = $region25
    $region24: #{tpu_custom_call.1} parent=1 // pred_region
      _
    $region25: #{tpu_custom_call.1} parent=1 // pred_fallthru
      _
    // Predicated region
    $region26: #{tpu_custom_call.1} parent=1 // pred_check
      _
    $region27: #{tpu_custom_call.1} parent=1 // pred_check_branch
      %52 = sbr.rel (0) target = $region29
    $region28: #{tpu_custom_call.1} parent=1 // pred_region
      _
    $region29: #{tpu_custom_call.1} parent=1 // pred_fallthru
      _
    // Predicated region
    $region30: #{tpu_custom_call.1} parent=1 // pred_check
      _
    $region31: #{tpu_custom_call.1} parent=1 // pred_check_branch
      %54 = sbr.rel (0) target = $region33
    $region32: #{tpu_custom_call.1} parent=1 // pred_region
      _
    $region33: #{tpu_custom_call.1} parent=1 // pred_fallthru
      _
    // Predicated region
    $region34: #{tpu_custom_call.1} parent=1 // pred_check
      _
    $region35: #{tpu_custom_call.1} parent=1 // pred_check_branch
      %56 = sbr.rel (0) target = $region37
    $region36: #{tpu_custom_call.1} parent=1 // pred_region
      _
    $region37: #{tpu_custom_call.1} parent=1 // pred_fallthru
      _
    // Predicated region
    $region38: #{tpu_custom_call.1} parent=1 // pred_check
      _
    $region39: #{tpu_custom_call.1} parent=1 // pred_check_branch
      %58 = sbr.rel (0) target = $region41
    $region40: #{tpu_custom_call.1} parent=1 // pred_region
      _
    $region41: #{tpu_custom_call.1} parent=1 // pred_fallthru
      _
    // Predicated region
    $region42: #{tpu_custom_call.1} parent=1 // pred_check
      _
    $region43: #{tpu_custom_call.1} parent=1 // pred_check_branch
      %60 = sbr.rel (0) target = $region45
    $region44: #{tpu_custom_call.1} parent=1 // pred_region
      _
    $region45: #{tpu_custom_call.1} parent=1 // pred_fallthru
      _
    // Predicated region
    $region46: #{tpu_custom_call.1} parent=1 // pred_check
      _
    $region47: #{tpu_custom_call.1} parent=1 // pred_check_branch
      %62 = sbr.rel (0) target = $region49
    $region48: #{tpu_custom_call.1} parent=1 // pred_region
      _
    $region49: #{tpu_custom_call.1} parent=1 // pred_fallthru
      _
    // Predicated region
    $region50: #{tpu_custom_call.1} parent=1 // pred_check
      _
    $region51: #{tpu_custom_call.1} parent=1 // pred_check_branch
      %64 = sbr.rel (0) target = $region53
    $region52: #{tpu_custom_call.1} parent=1 // pred_region
      _
    $region53: #{tpu_custom_call.1} parent=1 // pred_fallthru
      _
    // Predicated region
    $region54: #{tpu_custom_call.1} parent=1 // pred_check
      _
    $region55: #{tpu_custom_call.1} parent=1 // pred_check_branch
      %66 = sbr.rel (0) target = $region57
    $region56: #{tpu_custom_call.1} parent=1 // pred_region
      _
    $region57: #{tpu_custom_call.1} parent=1 // pred_fallthru
      _
    // Predicated region
    $region58: #{tpu_custom_call.1} parent=1 // pred_check
      _
    $region59: #{tpu_custom_call.1} parent=1 // pred_check_branch
      %68 = sbr.rel (0) target = $region61
    $region60: #{tpu_custom_call.1} parent=1 // pred_region
      _
    $region61: #{tpu_custom_call.1} parent=1 // pred_fallthru
      _
    // Predicated region
    $region62: #{tpu_custom_call.1} parent=1 // pred_check
      _
    $region63: #{tpu_custom_call.1} parent=1 // pred_check_branch
      %70 = sbr.rel (0) target = $region65
    $region64: #{tpu_custom_call.1} parent=1 // pred_region
      _
    $region65: #{tpu_custom_call.1} parent=1 // pred_fallthru
      _
    // Predicated region
    $region66: #{tpu_custom_call.1} parent=1 // pred_check
      _
    $region67: #{tpu_custom_call.1} parent=1 // pred_check_branch
      %72 = sbr.rel (0) target = $region69
    $region68: #{tpu_custom_call.1} parent=1 // pred_region
      _
    $region69: #{tpu_custom_call.1} parent=1 // pred_fallthru
      _
    // Predicated region
    $region70: #{tpu_custom_call.1} parent=1 // pred_check
      _
    $region71: #{tpu_custom_call.1} parent=1 // pred_check_branch
      %74 = sbr.rel (0) target = $region73
    $region72: #{tpu_custom_call.1} parent=1 // pred_region
      _
    $region73: #{tpu_custom_call.1} parent=1 // pred_fallthru
      _
    // Predicated region
    $region74: #{tpu_custom_call.1} parent=1 // pred_check
      _
    $region75: #{tpu_custom_call.1} parent=1 // pred_check_branch
      %76 = sbr.rel (0) target = $region77
    $region76: #{tpu_custom_call.1} parent=1 // pred_region
      _
    $region77: #{tpu_custom_call.1} parent=1 // pred_fallthru
      _
    // Predicated region
    $region78: #{tpu_custom_call.1} parent=1 // pred_check
      _
    $region79: #{tpu_custom_call.1} parent=1 // pred_check_branch
      %78 = sbr.rel (0) target = $region81
    $region80: #{tpu_custom_call.1} parent=1 // pred_region
      _
    $region81: #{tpu_custom_call.1} parent=1 // pred_fallthru
      _
    // Predicated region
    $region82: #{tpu_custom_call.1} parent=1 // pred_check
      _
    $region83: #{tpu_custom_call.1} parent=1 // pred_check_branch
      %80 = sbr.rel (0) target = $region85
    $region84: #{tpu_custom_call.1} parent=1 // pred_region
      %82 = dma.done [#allocation4], 16384
    $region85: #{tpu_custom_call.1} parent=1 // pred_fallthru
      _
    %v83 = vld [vmem:[%s0] sm:$0xff]
    %v84 = vld [vmem:[%s0 + $0x8] sm:$0xff]
    %v85 = vld [vmem:[%s0 + $0x10] sm:$0xff]
    %v86 = vld [vmem:[%s0 + $0x18] sm:$0xff]
    %v87 = vld [vmem:[%s1] sm:$0xff]
    %v88 = vld [vmem:[#allocation3] sm:$0xff]
    %v89 = vld [vmem:[#allocation3 + $0x8] sm:$0xff]
    %v90 = vld [vmem:[#allocation3 + $0x10] sm:$0xff]
    %v91 = vld [vmem:[#allocation3 + $0x18] sm:$0xff]
    %v92 = vld [vmem:[#allocation3 + $0x20] sm:$0xff]
    %v93 = vld [vmem:[#allocation3 + $0x28] sm:$0xff]
    %v94 = vld [vmem:[#allocation3 + $0x30] sm:$0xff]
    %v95 = vld [vmem:[#allocation3 + $0x38] sm:$0xff]
    %v96 = vld [vmem:[#allocation3 + $0x40] sm:$0xff]
    %v97 = vld [vmem:[#allocation3 + $0x48] sm:$0xff]
    %v98 = vld [vmem:[#allocation3 + $0x50] sm:$0xff]
    %v99 = vld [vmem:[#allocation3 + $0x58] sm:$0xff]
    %v100 = vld [vmem:[#allocation3 + $0x60] sm:$0xff]
    %v101 = vld [vmem:[#allocation3 + $0x68] sm:$0xff]
    %v102 = vld [vmem:[#allocation3 + $0x70] sm:$0xff]
    %v103 = vld [vmem:[#allocation3 + $0x78] sm:$0xff]
    %v104 = vld [vmem:[#allocation3 + $0x80] sm:$0xff]
    %v105 = vld [vmem:[#allocation3 + $0x88] sm:$0xff]
    %v106 = vld [vmem:[#allocation3 + $0x90] sm:$0xff]
    %v107 = vld [vmem:[#allocation3 + $0x98] sm:$0xff]
    %v108 = vld [vmem:[#allocation3 + $0xa0] sm:$0xff]
    %v109 = vld [vmem:[#allocation3 + $0xa8] sm:$0xff]
    %v110 = vld [vmem:[#allocation3 + $0xb0] sm:$0xff]
    %v111 = vld [vmem:[#allocation3 + $0xb8] sm:$0xff]
    %v112 = vld [vmem:[#allocation3 + $0xc0] sm:$0xff]
    %v113 = vld [vmem:[#allocation3 + $0xc8] sm:$0xff]
    %v114 = vld [vmem:[#allocation3 + $0xd0] sm:$0xff]
    %v115 = vld [vmem:[#allocation3 + $0xd8] sm:$0xff]
    %v116 = vld [vmem:[#allocation3 + $0xe0] sm:$0xff]
    %v117 = vld [vmem:[#allocation3 + $0xe8] sm:$0xff]
    %v118 = vld [vmem:[#allocation3 + $0xf0] sm:$0xff]
    %v119 = vld [vmem:[#allocation3 + $0xf8] sm:$0xff]
    %v120 = vld [vmem:[#allocation3 + $0x100] sm:$0xff]
    %v121 = vld [vmem:[#allocation3 + $0x108] sm:$0xff]
    %v122 = vld [vmem:[#allocation3 + $0x110] sm:$0xff]
    %v123 = vld [vmem:[#allocation3 + $0x118] sm:$0xff]
    %v124 = vld [vmem:[#allocation3 + $0x120] sm:$0xff]
    %v125 = vld [vmem:[#allocation3 + $0x128] sm:$0xff]
    %v126 = vld [vmem:[#allocation3 + $0x130] sm:$0xff]
    %v127 = vld [vmem:[#allocation3 + $0x138] sm:$0xff]
    %v128 = vld [vmem:[#allocation3 + $0x140] sm:$0xff]
    %v129 = vld [vmem:[#allocation3 + $0x148] sm:$0xff]
    %v130 = vld [vmem:[#allocation3 + $0x150] sm:$0xff]
    %v131 = vld [vmem:[#allocation3 + $0x158] sm:$0xff]
    %v132 = vld [vmem:[#allocation3 + $0x160] sm:$0xff]
    %v133 = vld [vmem:[#allocation3 + $0x168] sm:$0xff]
    %v134 = vld [vmem:[#allocation3 + $0x170] sm:$0xff]
    %v135 = vld [vmem:[#allocation3 + $0x178] sm:$0xff]
    %v136 = vld [vmem:[#allocation3 + $0x180] sm:$0xff]
    %v137 = vld [vmem:[#allocation3 + $0x188] sm:$0xff]
    %v138 = vld [vmem:[#allocation3 + $0x190] sm:$0xff]
    %v139 = vld [vmem:[#allocation3 + $0x198] sm:$0xff]
    %v140 = vld [vmem:[#allocation3 + $0x1a0] sm:$0xff]
    %v141 = vld [vmem:[#allocation3 + $0x1a8] sm:$0xff]
    %v142 = vld [vmem:[#allocation3 + $0x1b0] sm:$0xff]
    %v143 = vld [vmem:[#allocation3 + $0x1b8] sm:$0xff]
    %v144 = vld [vmem:[#allocation3 + $0x1c0] sm:$0xff]
    %v145 = vld [vmem:[#allocation3 + $0x1c8] sm:$0xff]
    %v146 = vld [vmem:[#allocation3 + $0x1d0] sm:$0xff]
    %v147 = vld [vmem:[#allocation3 + $0x1d8] sm:$0xff]
    %v148 = vld [vmem:[#allocation3 + $0x1e0] sm:$0xff]
    %v149 = vld [vmem:[#allocation3 + $0x1e8] sm:$0xff]
    %v150 = vld [vmem:[#allocation3 + $0x1f0] sm:$0xff]
    %v151 = vld [vmem:[#allocation3 + $0x1f8] sm:$0xff]
    %v152 = vld [vmem:[#allocation3 + $0x200] sm:$0xff]
    %v153 = vld [vmem:[#allocation3 + $0x208] sm:$0xff]
    %v154 = vld [vmem:[#allocation3 + $0x210] sm:$0xff]
    %v155 = vld [vmem:[#allocation3 + $0x218] sm:$0xff]
    %v156 = vld [vmem:[#allocation3 + $0x220] sm:$0xff]
    %v157 = vld [vmem:[#allocation3 + $0x228] sm:$0xff]
    %v158 = vld [vmem:[#allocation3 + $0x230] sm:$0xff]
    %v159 = vld [vmem:[#allocation3 + $0x238] sm:$0xff]
    %v160 = vld [vmem:[#allocation3 + $0x240] sm:$0xff]
    %v161 = vld [vmem:[#allocation3 + $0x248] sm:$0xff]
    %v162 = vld [vmem:[#allocation3 + $0x250] sm:$0xff]
    %v163 = vld [vmem:[#allocation3 + $0x258] sm:$0xff]
    %v164 = vld [vmem:[#allocation3 + $0x260] sm:$0xff]
    %v165 = vld [vmem:[#allocation3 + $0x268] sm:$0xff]
    %v166 = vld [vmem:[#allocation3 + $0x270] sm:$0xff]
    %v167 = vld [vmem:[#allocation3 + $0x278] sm:$0xff]
    %v168 = vld [vmem:[#allocation3 + $0x280] sm:$0xff]
    %v169 = vld [vmem:[#allocation3 + $0x288] sm:$0xff]
    %v170 = vld [vmem:[#allocation3 + $0x290] sm:$0xff]
    %v171 = vld [vmem:[#allocation3 + $0x298] sm:$0xff]
    %v172 = vld [vmem:[#allocation3 + $0x2a0] sm:$0xff]
    %v173 = vld [vmem:[#allocation3 + $0x2a8] sm:$0xff]
    %v174 = vld [vmem:[#allocation3 + $0x2b0] sm:$0xff]
    %v175 = vld [vmem:[#allocation3 + $0x2b8] sm:$0xff]
    %v176 = vld [vmem:[#allocation3 + $0x2c0] sm:$0xff]
    %v177 = vld [vmem:[#allocation3 + $0x2c8] sm:$0xff]
    %v178 = vld [vmem:[#allocation3 + $0x2d0] sm:$0xff]
    %v179 = vld [vmem:[#allocation3 + $0x2d8] sm:$0xff]
    %v180 = vld [vmem:[#allocation3 + $0x2e0] sm:$0xff]
    %v181 = vld [vmem:[#allocation3 + $0x2e8] sm:$0xff]
    %v182 = vld [vmem:[#allocation3 + $0x2f0] sm:$0xff]
    %v183 = vld [vmem:[#allocation3 + $0x2f8] sm:$0xff]
    %v184 = vld [vmem:[#allocation3 + $0x300] sm:$0xff]
    %v185 = vld [vmem:[#allocation3 + $0x308] sm:$0xff]
    %v186 = vld [vmem:[#allocation3 + $0x310] sm:$0xff]
    %v187 = vld [vmem:[#allocation3 + $0x318] sm:$0xff]
    %v188 = vld [vmem:[#allocation3 + $0x320] sm:$0xff]
    %v189 = vld [vmem:[#allocation3 + $0x328] sm:$0xff]
    %v190 = vld [vmem:[#allocation3 + $0x330] sm:$0xff]
    %v191 = vld [vmem:[#allocation3 + $0x338] sm:$0xff]
    %v192 = vld [vmem:[#allocation3 + $0x340] sm:$0xff]
    %v193 = vld [vmem:[#allocation3 + $0x348] sm:$0xff]
    %v194 = vld [vmem:[#allocation3 + $0x350] sm:$0xff]
    %v195 = vld [vmem:[#allocation3 + $0x358] sm:$0xff]
    %v196 = vld [vmem:[#allocation3 + $0x360] sm:$0xff]
    %v197 = vld [vmem:[#allocation3 + $0x368] sm:$0xff]
    %v198 = vld [vmem:[#allocation3 + $0x370] sm:$0xff]
    %v199 = vld [vmem:[#allocation3 + $0x378] sm:$0xff]
    %v200 = vld [vmem:[#allocation3 + $0x380] sm:$0xff]
    %v201 = vld [vmem:[#allocation3 + $0x388] sm:$0xff]
    %v202 = vld [vmem:[#allocation3 + $0x390] sm:$0xff]
    %v203 = vld [vmem:[#allocation3 + $0x398] sm:$0xff]
    %v204 = vld [vmem:[#allocation3 + $0x3a0] sm:$0xff]
    %v205 = vld [vmem:[#allocation3 + $0x3a8] sm:$0xff]
    %v206 = vld [vmem:[#allocation3 + $0x3b0] sm:$0xff]
    %v207 = vld [vmem:[#allocation3 + $0x3b8] sm:$0xff]
    %v208 = vld [vmem:[#allocation3 + $0x3c0] sm:$0xff]
    %v209 = vld [vmem:[#allocation3 + $0x3c8] sm:$0xff]
    %v210 = vld [vmem:[#allocation3 + $0x3d0] sm:$0xff]
    %v211 = vld [vmem:[#allocation3 + $0x3d8] sm:$0xff]
    %v212 = vld [vmem:[#allocation3 + $0x3e0] sm:$0xff]
    %v213 = vld [vmem:[#allocation3 + $0x3e8] sm:$0xff]
    %v214 = vld [vmem:[#allocation3 + $0x3f0] sm:$0xff]
    %v215 = vld [vmem:[#allocation3 + $0x3f8] sm:$0xff]
    %v216 = vld [vmem:[%s3] sm:$0x3]
    %v217 = vld [vmem:[%s4] sm:$0xf]
    %v218 = vld [vmem:[%s4 + $0x4] sm:$0xf]
    %v219 = vld [vmem:[%s4 + $0x8] sm:$0xf]
    %v220 = vld [vmem:[%s4 + $0xc] sm:$0xf]
    %v221 = vld [vmem:[%s4 + $0x10] sm:$0xf]
    %v222 = vld [vmem:[%s4 + $0x14] sm:$0xf]
    %v223 = vld [vmem:[%s4 + $0x18] sm:$0xf]
    %v224 = vld [vmem:[%s4 + $0x1c] sm:$0xf]
    %v225 = vld [vmem:[%s4 + $0x20] sm:$0xf]
    %v226 = vld [vmem:[%s4 + $0x24] sm:$0xf]
    %v227 = vld [vmem:[%s4 + $0x28] sm:$0xf]
    %v228 = vld [vmem:[%s4 + $0x2c] sm:$0xf]
    %v229 = vld [vmem:[%s4 + $0x30] sm:$0xf]
    %v230 = vld [vmem:[%s4 + $0x34] sm:$0xf]
    %v231 = vld [vmem:[%s4 + $0x38] sm:$0xf]
    %v232 = vld [vmem:[%s4 + $0x3c] sm:$0xf]
    %v233 = vld [vmem:[%s4 + $0x40] sm:$0xf]
    %v234 = vld [vmem:[%s4 + $0x44] sm:$0xf]
    %v235 = vld [vmem:[%s4 + $0x48] sm:$0xf]
    %v236 = vld [vmem:[%s4 + $0x4c] sm:$0xf]
    %v237 = vld [vmem:[%s4 + $0x50] sm:$0xf]
    %v238 = vld [vmem:[%s4 + $0x54] sm:$0xf]
    %v239 = vld [vmem:[%s4 + $0x58] sm:$0xf]
    %v240 = vld [vmem:[%s4 + $0x5c] sm:$0xf]
    %v241 = vld [vmem:[%s4 + $0x60] sm:$0xf]
    %v242 = vld [vmem:[%s4 + $0x64] sm:$0xf]
    %v243 = vld [vmem:[%s4 + $0x68] sm:$0xf]
    %v244 = vld [vmem:[%s4 + $0x6c] sm:$0xf]
    %v245 = vld [vmem:[%s4 + $0x70] sm:$0xf]
    %v246 = vld [vmem:[%s4 + $0x74] sm:$0xf]
    %v247 = vld [vmem:[%s4 + $0x78] sm:$0xf]
    %v248 = vld [vmem:[%s4 + $0x7c] sm:$0xf]
    %v249 = vld [vmem:[%s5] sm:$0x1]
    %v250 = vld [vmem:[%s6] sm:$0xff]
    %v251 = vld [vmem:[%s7] sm:$0x1]
    %v252 = vld [vmem:[%s8] sm:$0xff]
    %v253 = vld [vmem:[%s8 + $0x8] sm:$0xff]
    %v254 = vld [vmem:[%s8 + $0x10] sm:$0xff]
    %v255 = vld [vmem:[%s8 + $0x18] sm:$0xff]
    %v256 = vld [vmem:[%s8 + $0x20] sm:$0xff]
    %v257 = vld [vmem:[%s8 + $0x28] sm:$0xff]
    %v258 = vld [vmem:[%s8 + $0x30] sm:$0xff]
    %v259 = vld [vmem:[%s8 + $0x38] sm:$0xff]
    %v260 = vld [vmem:[%s9] sm:$0x1]
    %v261 = vld [vmem:[%s10] sm:$0xff]
    %v262 = vld [vmem:[%s10 + $0x8] sm:$0xff]
    %v263 = vld [vmem:[%s10 + $0x10] sm:$0xff]
    %v264 = vld [vmem:[%s10 + $0x18] sm:$0xff]
    %v265 = vld [vmem:[%s10 + $0x20] sm:$0xff]
    %v266 = vld [vmem:[%s10 + $0x28] sm:$0xff]
    %v267 = vld [vmem:[%s10 + $0x30] sm:$0xff]
    %v268 = vld [vmem:[%s10 + $0x38] sm:$0xff]
    %v269 = vld [vmem:[%s10 + $0x40] sm:$0xff]
    %v270 = vld [vmem:[%s10 + $0x48] sm:$0xff]
    %v271 = vld [vmem:[%s10 + $0x50] sm:$0xff]
    %v272 = vld [vmem:[%s10 + $0x58] sm:$0xff]
    %v273 = vld [vmem:[%s10 + $0x60] sm:$0xff]
    %v274 = vld [vmem:[%s10 + $0x68] sm:$0xff]
    %v275 = vld [vmem:[%s10 + $0x70] sm:$0xff]
    %v276 = vld [vmem:[%s10 + $0x78] sm:$0xff]
    %v277 = vld [vmem:[%s11] sm:$0xff]
    %v278 = vld [vmem:[%s11 + $0x8] sm:$0xff]
    %v279 = vld [vmem:[%s11 + $0x10] sm:$0xff]
    %v280 = vld [vmem:[%s11 + $0x18] sm:$0xff]
    %v281 = vld [vmem:[%s12] sm:$0x1]
    %v282 = vld [vmem:[%s13] sm:$0xff]
    %v283 = vld [vmem:[%s13 + $0x8] sm:$0xff]
    %v284 = vld [vmem:[%s13 + $0x10] sm:$0xff]
    %v285 = vld [vmem:[%s13 + $0x18] sm:$0xff]
    %v286 = vld [vmem:[%s13 + $0x20] sm:$0xff]
    %v287 = vld [vmem:[%s13 + $0x28] sm:$0xff]
    %v288 = vld [vmem:[%s13 + $0x30] sm:$0xff]
    %v289 = vld [vmem:[%s13 + $0x38] sm:$0xff]
    %v290 = vld [vmem:[%s14] sm:$0x1]
    %v292 = vperm.slane %v216, 0
    %v293 = vperm.slane %v216, 1
    %v300 = vunpack.c.l.b16 %v83
    %v301 = vunpack.c.h.b16 %v83
    %v302 = vunpack.c.l.b16 %v84
    %v303 = vunpack.c.h.b16 %v84
    %v304 = vunpack.c.l.b16 %v85
    %v305 = vunpack.c.h.b16 %v85
    %v306 = vunpack.c.l.b16 %v86
    %v307 = vunpack.c.h.b16 %v86
    %v308 = vpack.c.b16 %v300, %v300
    %v309 = vpack.c.b16 %v301, %v301
    %v310 = vpack.c.b16 %v302, %v302
    %v311 = vpack.c.b16 %v303, %v303
    %v312 = vpack.c.b16 %v304, %v304
    %v313 = vpack.c.b16 %v305, %v305
    %v314 = vpack.c.b16 %v306, %v306
    %v315 = vpack.c.b16 %v307, %v307
    %v452 = vunpack.c.l.b16 %v88
    %v453 = vunpack.c.h.b16 %v88
    %v454 = vunpack.c.l.b16 %v89
    %v455 = vunpack.c.h.b16 %v89
    %v456 = vunpack.c.l.b16 %v90
    %v457 = vunpack.c.h.b16 %v90
    %v458 = vunpack.c.l.b16 %v91
    %v459 = vunpack.c.h.b16 %v91
    %v460 = vunpack.c.l.b16 %v92
    %v461 = vunpack.c.h.b16 %v92
    %v462 = vunpack.c.l.b16 %v93
    %v463 = vunpack.c.h.b16 %v93
    %v464 = vunpack.c.l.b16 %v94
    %v465 = vunpack.c.h.b16 %v94
    %v466 = vunpack.c.l.b16 %v95
    %v467 = vunpack.c.h.b16 %v95
    %v468 = vunpack.c.l.b16 %v96
    %v469 = vunpack.c.h.b16 %v96
    %v470 = vunpack.c.l.b16 %v97
    %v471 = vunpack.c.h.b16 %v97
    %v472 = vunpack.c.l.b16 %v98
    %v473 = vunpack.c.h.b16 %v98
    %v474 = vunpack.c.l.b16 %v99
    %v475 = vunpack.c.h.b16 %v99
    %v476 = vunpack.c.l.b16 %v100
    %v477 = vunpack.c.h.b16 %v100
    %v478 = vunpack.c.l.b16 %v101
    %v479 = vunpack.c.h.b16 %v101
    %v480 = vunpack.c.l.b16 %v102
    %v481 = vunpack.c.h.b16 %v102
    %v482 = vunpack.c.l.b16 %v103
    %v483 = vunpack.c.h.b16 %v103
    %v484 = vunpack.c.l.b16 %v104
    %v485 = vunpack.c.h.b16 %v104
    %v486 = vunpack.c.l.b16 %v105
    %v487 = vunpack.c.h.b16 %v105
    %v488 = vunpack.c.l.b16 %v106
    %v489 = vunpack.c.h.b16 %v106
    %v490 = vunpack.c.l.b16 %v107
    %v491 = vunpack.c.h.b16 %v107
    %v492 = vunpack.c.l.b16 %v108
    %v493 = vunpack.c.h.b16 %v108
    %v494 = vunpack.c.l.b16 %v109
    %v495 = vunpack.c.h.b16 %v109
    %v496 = vunpack.c.l.b16 %v110
    %v497 = vunpack.c.h.b16 %v110
    %v498 = vunpack.c.l.b16 %v111
    %v499 = vunpack.c.h.b16 %v111
    %v500 = vunpack.c.l.b16 %v112
    %v501 = vunpack.c.h.b16 %v112
    %v502 = vunpack.c.l.b16 %v113
    %v503 = vunpack.c.h.b16 %v113
    %v504 = vunpack.c.l.b16 %v114
    %v505 = vunpack.c.h.b16 %v114
    %v506 = vunpack.c.l.b16 %v115
    %v507 = vunpack.c.h.b16 %v115
    %v508 = vunpack.c.l.b16 %v116
    %v509 = vunpack.c.h.b16 %v116
    %v510 = vunpack.c.l.b16 %v117
    %v511 = vunpack.c.h.b16 %v117
    %v512 = vunpack.c.l.b16 %v118
    %v513 = vunpack.c.h.b16 %v118
    %v514 = vunpack.c.l.b16 %v119
    %v515 = vunpack.c.h.b16 %v119
    %v516 = vunpack.c.l.b16 %v120
    %v517 = vunpack.c.h.b16 %v120
    %v518 = vunpack.c.l.b16 %v121
    %v519 = vunpack.c.h.b16 %v121
    %v520 = vunpack.c.l.b16 %v122
    %v521 = vunpack.c.h.b16 %v122
    %v522 = vunpack.c.l.b16 %v123
    %v523 = vunpack.c.h.b16 %v123
    %v524 = vunpack.c.l.b16 %v124
    %v525 = vunpack.c.h.b16 %v124
    %v526 = vunpack.c.l.b16 %v125
    %v527 = vunpack.c.h.b16 %v125
    %v528 = vunpack.c.l.b16 %v126
    %v529 = vunpack.c.h.b16 %v126
    %v530 = vunpack.c.l.b16 %v127
    %v531 = vunpack.c.h.b16 %v127
    %v532 = vunpack.c.l.b16 %v128
    %v533 = vunpack.c.h.b16 %v128
    %v534 = vunpack.c.l.b16 %v129
    %v535 = vunpack.c.h.b16 %v129
    %v536 = vunpack.c.l.b16 %v130
    %v537 = vunpack.c.h.b16 %v130
    %v538 = vunpack.c.l.b16 %v131
    %v539 = vunpack.c.h.b16 %v131
    %v540 = vunpack.c.l.b16 %v132
    %v541 = vunpack.c.h.b16 %v132
    %v542 = vunpack.c.l.b16 %v133
    %v543 = vunpack.c.h.b16 %v133
    %v544 = vunpack.c.l.b16 %v134
    %v545 = vunpack.c.h.b16 %v134
    %v546 = vunpack.c.l.b16 %v135
    %v547 = vunpack.c.h.b16 %v135
    %v548 = vunpack.c.l.b16 %v136
    %v549 = vunpack.c.h.b16 %v136
    %v550 = vunpack.c.l.b16 %v137
    %v551 = vunpack.c.h.b16 %v137
    %v552 = vunpack.c.l.b16 %v138
    %v553 = vunpack.c.h.b16 %v138
    %v554 = vunpack.c.l.b16 %v139
    %v555 = vunpack.c.h.b16 %v139
    %v556 = vunpack.c.l.b16 %v140
    %v557 = vunpack.c.h.b16 %v140
    %v558 = vunpack.c.l.b16 %v141
    %v559 = vunpack.c.h.b16 %v141
    %v560 = vunpack.c.l.b16 %v142
    %v561 = vunpack.c.h.b16 %v142
    %v562 = vunpack.c.l.b16 %v143
    %v563 = vunpack.c.h.b16 %v143
    %v564 = vunpack.c.l.b16 %v144
    %v565 = vunpack.c.h.b16 %v144
    %v566 = vunpack.c.l.b16 %v145
    %v567 = vunpack.c.h.b16 %v145
    %v568 = vunpack.c.l.b16 %v146
    %v569 = vunpack.c.h.b16 %v146
    %v570 = vunpack.c.l.b16 %v147
    %v571 = vunpack.c.h.b16 %v147
    %v572 = vunpack.c.l.b16 %v148
    %v573 = vunpack.c.h.b16 %v148
    %v574 = vunpack.c.l.b16 %v149
    %v575 = vunpack.c.h.b16 %v149
    %v576 = vunpack.c.l.b16 %v150
    %v577 = vunpack.c.h.b16 %v150
    %v578 = vunpack.c.l.b16 %v151
    %v579 = vunpack.c.h.b16 %v151
    %v580 = vunpack.c.l.b16 %v152
    %v581 = vunpack.c.h.b16 %v152
    %v582 = vunpack.c.l.b16 %v153
    %v583 = vunpack.c.h.b16 %v153
    %v584 = vunpack.c.l.b16 %v154
    %v585 = vunpack.c.h.b16 %v154
    %v586 = vunpack.c.l.b16 %v155
    %v587 = vunpack.c.h.b16 %v155
    %v588 = vunpack.c.l.b16 %v156
    %v589 = vunpack.c.h.b16 %v156
    %v590 = vunpack.c.l.b16 %v157
    %v591 = vunpack.c.h.b16 %v157
    %v592 = vunpack.c.l.b16 %v158
    %v593 = vunpack.c.h.b16 %v158
    %v594 = vunpack.c.l.b16 %v159
    %v595 = vunpack.c.h.b16 %v159
    %v596 = vunpack.c.l.b16 %v160
    %v597 = vunpack.c.h.b16 %v160
    %v598 = vunpack.c.l.b16 %v161
    %v599 = vunpack.c.h.b16 %v161
    %v600 = vunpack.c.l.b16 %v162
    %v601 = vunpack.c.h.b16 %v162
    %v602 = vunpack.c.l.b16 %v163
    %v603 = vunpack.c.h.b16 %v163
    %v604 = vunpack.c.l.b16 %v164
    %v605 = vunpack.c.h.b16 %v164
    %v606 = vunpack.c.l.b16 %v165
    %v607 = vunpack.c.h.b16 %v165
    %v608 = vunpack.c.l.b16 %v166
    %v609 = vunpack.c.h.b16 %v166
    %v610 = vunpack.c.l.b16 %v167
    %v611 = vunpack.c.h.b16 %v167
    %v612 = vunpack.c.l.b16 %v168
    %v613 = vunpack.c.h.b16 %v168
    %v614 = vunpack.c.l.b16 %v169
    %v615 = vunpack.c.h.b16 %v169
    %v616 = vunpack.c.l.b16 %v170
    %v617 = vunpack.c.h.b16 %v170
    %v618 = vunpack.c.l.b16 %v171
    %v619 = vunpack.c.h.b16 %v171
    %v620 = vunpack.c.l.b16 %v172
    %v621 = vunpack.c.h.b16 %v172
    %v622 = vunpack.c.l.b16 %v173
    %v623 = vunpack.c.h.b16 %v173
    %v624 = vunpack.c.l.b16 %v174
    %v625 = vunpack.c.h.b16 %v174
    %v626 = vunpack.c.l.b16 %v175
    %v627 = vunpack.c.h.b16 %v175
    %v628 = vunpack.c.l.b16 %v176
    %v629 = vunpack.c.h.b16 %v176
    %v630 = vunpack.c.l.b16 %v177
    %v631 = vunpack.c.h.b16 %v177
    %v632 = vunpack.c.l.b16 %v178
    %v633 = vunpack.c.h.b16 %v178
    %v634 = vunpack.c.l.b16 %v179
    %v635 = vunpack.c.h.b16 %v179
    %v636 = vunpack.c.l.b16 %v180
    %v637 = vunpack.c.h.b16 %v180
    %v638 = vunpack.c.l.b16 %v181
    %v639 = vunpack.c.h.b16 %v181
    %v640 = vunpack.c.l.b16 %v182
    %v641 = vunpack.c.h.b16 %v182
    %v642 = vunpack.c.l.b16 %v183
    %v643 = vunpack.c.h.b16 %v183
    %v644 = vunpack.c.l.b16 %v184
    %v645 = vunpack.c.h.b16 %v184
    %v646 = vunpack.c.l.b16 %v185
    %v647 = vunpack.c.h.b16 %v185
    %v648 = vunpack.c.l.b16 %v186
    %v649 = vunpack.c.h.b16 %v186
    %v650 = vunpack.c.l.b16 %v187
    %v651 = vunpack.c.h.b16 %v187
    %v652 = vunpack.c.l.b16 %v188
    %v653 = vunpack.c.h.b16 %v188
    %v654 = vunpack.c.l.b16 %v189
    %v655 = vunpack.c.h.b16 %v189
    %v656 = vunpack.c.l.b16 %v190
    %v657 = vunpack.c.h.b16 %v190
    %v658 = vunpack.c.l.b16 %v191
    %v659 = vunpack.c.h.b16 %v191
    %v660 = vunpack.c.l.b16 %v192
    %v661 = vunpack.c.h.b16 %v192
    %v662 = vunpack.c.l.b16 %v193
    %v663 = vunpack.c.h.b16 %v193
    %v664 = vunpack.c.l.b16 %v194
    %v665 = vunpack.c.h.b16 %v194
    %v666 = vunpack.c.l.b16 %v195
    %v667 = vunpack.c.h.b16 %v195
    %v668 = vunpack.c.l.b16 %v196
    %v669 = vunpack.c.h.b16 %v196
    %v670 = vunpack.c.l.b16 %v197
    %v671 = vunpack.c.h.b16 %v197
    %v672 = vunpack.c.l.b16 %v198
    %v673 = vunpack.c.h.b16 %v198
    %v674 = vunpack.c.l.b16 %v199
    %v675 = vunpack.c.h.b16 %v199
    %v676 = vunpack.c.l.b16 %v200
    %v677 = vunpack.c.h.b16 %v200
    %v678 = vunpack.c.l.b16 %v201
    %v679 = vunpack.c.h.b16 %v201
    %v680 = vunpack.c.l.b16 %v202
    %v681 = vunpack.c.h.b16 %v202
    %v682 = vunpack.c.l.b16 %v203
    %v683 = vunpack.c.h.b16 %v203
    %v684 = vunpack.c.l.b16 %v204
    %v685 = vunpack.c.h.b16 %v204
    %v686 = vunpack.c.l.b16 %v205
    %v687 = vunpack.c.h.b16 %v205
    %v688 = vunpack.c.l.b16 %v206
    %v689 = vunpack.c.h.b16 %v206
    %v690 = vunpack.c.l.b16 %v207
    %v691 = vunpack.c.h.b16 %v207
    %v692 = vunpack.c.l.b16 %v208
    %v693 = vunpack.c.h.b16 %v208
    %v694 = vunpack.c.l.b16 %v209
    %v695 = vunpack.c.h.b16 %v209
    %v696 = vunpack.c.l.b16 %v210
    %v697 = vunpack.c.h.b16 %v210
    %v698 = vunpack.c.l.b16 %v211
    %v699 = vunpack.c.h.b16 %v211
    %v700 = vunpack.c.l.b16 %v212
    %v701 = vunpack.c.h.b16 %v212
    %v702 = vunpack.c.l.b16 %v213
    %v703 = vunpack.c.h.b16 %v213
    %v704 = vunpack.c.l.b16 %v214
    %v705 = vunpack.c.h.b16 %v214
    %v706 = vunpack.c.l.b16 %v215
    %v707 = vunpack.c.h.b16 %v215
    %v708 = vpack.c.b16 %v454, %v452
    %v709 = vpack.c.b16 %v455, %v453
    %v710 = vpack.c.b16 %v458, %v456
    %v711 = vpack.c.b16 %v459, %v457
    %v712 = vpack.c.b16 %v462, %v460
    %v713 = vpack.c.b16 %v463, %v461
    %v714 = vpack.c.b16 %v466, %v464
    %v715 = vpack.c.b16 %v467, %v465
    %v716 = vpack.c.b16 %v470, %v468
    %v717 = vpack.c.b16 %v471, %v469
    %v718 = vpack.c.b16 %v474, %v472
    %v719 = vpack.c.b16 %v475, %v473
    %v720 = vpack.c.b16 %v478, %v476
    %v721 = vpack.c.b16 %v479, %v477
    %v722 = vpack.c.b16 %v482, %v480
    %v723 = vpack.c.b16 %v483, %v481
    %v724 = vpack.c.b16 %v486, %v484
    %v725 = vpack.c.b16 %v487, %v485
    %v726 = vpack.c.b16 %v490, %v488
    %v727 = vpack.c.b16 %v491, %v489
    %v728 = vpack.c.b16 %v494, %v492
    %v729 = vpack.c.b16 %v495, %v493
    %v730 = vpack.c.b16 %v498, %v496
    %v731 = vpack.c.b16 %v499, %v497
    %v732 = vpack.c.b16 %v502, %v500
    %v733 = vpack.c.b16 %v503, %v501
    %v734 = vpack.c.b16 %v506, %v504
    %v735 = vpack.c.b16 %v507, %v505
    %v736 = vpack.c.b16 %v510, %v508
    %v737 = vpack.c.b16 %v511, %v509
    %v738 = vpack.c.b16 %v514, %v512
    %v739 = vpack.c.b16 %v515, %v513
    %v740 = vpack.c.b16 %v518, %v516
    %v741 = vpack.c.b16 %v519, %v517
    %v742 = vpack.c.b16 %v522, %v520
    %v743 = vpack.c.b16 %v523, %v521
    %v744 = vpack.c.b16 %v526, %v524
    %v745 = vpack.c.b16 %v527, %v525
    %v746 = vpack.c.b16 %v530, %v528
    %v747 = vpack.c.b16 %v531, %v529
    %v748 = vpack.c.b16 %v534, %v532
    %v749 = vpack.c.b16 %v535, %v533
    %v750 = vpack.c.b16 %v538, %v536
    %v751 = vpack.c.b16 %v539, %v537
    %v752 = vpack.c.b16 %v542, %v540
    %v753 = vpack.c.b16 %v543, %v541
    %v754 = vpack.c.b16 %v546, %v544
    %v755 = vpack.c.b16 %v547, %v545
    %v756 = vpack.c.b16 %v550, %v548
    %v757 = vpack.c.b16 %v551, %v549
    %v758 = vpack.c.b16 %v554, %v552
    %v759 = vpack.c.b16 %v555, %v553
    %v760 = vpack.c.b16 %v558, %v556
    %v761 = vpack.c.b16 %v559, %v557
    %v762 = vpack.c.b16 %v562, %v560
    %v763 = vpack.c.b16 %v563, %v561
    %v764 = vpack.c.b16 %v566, %v564
    %v765 = vpack.c.b16 %v567, %v565
    %v766 = vpack.c.b16 %v570, %v568
    %v767 = vpack.c.b16 %v571, %v569
    %v768 = vpack.c.b16 %v574, %v572
    %v769 = vpack.c.b16 %v575, %v573
    %v770 = vpack.c.b16 %v578, %v576
    %v771 = vpack.c.b16 %v579, %v577
    %v772 = vpack.c.b16 %v582, %v580
    %v773 = vpack.c.b16 %v583, %v581
    %v774 = vpack.c.b16 %v586, %v584
    %v775 = vpack.c.b16 %v587, %v585
    %v776 = vpack.c.b16 %v590, %v588
    %v777 = vpack.c.b16 %v591, %v589
    %v778 = vpack.c.b16 %v594, %v592
    %v779 = vpack.c.b16 %v595, %v593
    %v780 = vpack.c.b16 %v598, %v596
    %v781 = vpack.c.b16 %v599, %v597
    %v782 = vpack.c.b16 %v602, %v600
    %v783 = vpack.c.b16 %v603, %v601
    %v784 = vpack.c.b16 %v606, %v604
    %v785 = vpack.c.b16 %v607, %v605
    %v786 = vpack.c.b16 %v610, %v608
    %v787 = vpack.c.b16 %v611, %v609
    %v788 = vpack.c.b16 %v614, %v612
    %v789 = vpack.c.b16 %v615, %v613
    %v790 = vpack.c.b16 %v618, %v616
    %v791 = vpack.c.b16 %v619, %v617
    %v792 = vpack.c.b16 %v622, %v620
    %v793 = vpack.c.b16 %v623, %v621
    %v794 = vpack.c.b16 %v626, %v624
    %v795 = vpack.c.b16 %v627, %v625
    %v796 = vpack.c.b16 %v630, %v628
    %v797 = vpack.c.b16 %v631, %v629
    %v798 = vpack.c.b16 %v634, %v632
    %v799 = vpack.c.b16 %v635, %v633
    %v800 = vpack.c.b16 %v638, %v636
    %v801 = vpack.c.b16 %v639, %v637
    %v802 = vpack.c.b16 %v642, %v640
    %v803 = vpack.c.b16 %v643, %v641
    %v804 = vpack.c.b16 %v646, %v644
    %v805 = vpack.c.b16 %v647, %v645
    %v806 = vpack.c.b16 %v650, %v648
    %v807 = vpack.c.b16 %v651, %v649
    %v808 = vpack.c.b16 %v654, %v652
    %v809 = vpack.c.b16 %v655, %v653
    %v810 = vpack.c.b16 %v658, %v656
    %v811 = vpack.c.b16 %v659, %v657
    %v812 = vpack.c.b16 %v662, %v660
    %v813 = vpack.c.b16 %v663, %v661
    %v814 = vpack.c.b16 %v666, %v664
    %v815 = vpack.c.b16 %v667, %v665
    %v816 = vpack.c.b16 %v670, %v668
    %v817 = vpack.c.b16 %v671, %v669
    %v818 = vpack.c.b16 %v674, %v672
    %v819 = vpack.c.b16 %v675, %v673
    %v820 = vpack.c.b16 %v678, %v676
    %v821 = vpack.c.b16 %v679, %v677
    %v822 = vpack.c.b16 %v682, %v680
    %v823 = vpack.c.b16 %v683, %v681
    %v824 = vpack.c.b16 %v686, %v684
    %v825 = vpack.c.b16 %v687, %v685
    %v826 = vpack.c.b16 %v690, %v688
    %v827 = vpack.c.b16 %v691, %v689
    %v828 = vpack.c.b16 %v694, %v692
    %v829 = vpack.c.b16 %v695, %v693
    %v830 = vpack.c.b16 %v698, %v696
    %v831 = vpack.c.b16 %v699, %v697
    %v832 = vpack.c.b16 %v702, %v700
    %v833 = vpack.c.b16 %v703, %v701
    %v834 = vpack.c.b16 %v706, %v704
    %v835 = vpack.c.b16 %v707, %v705
    %964 = vmatpush.bf16.msra.mxu0 %v722
    %965 = vmatpush.bf16.msra.mxu0 %v720
    %966 = vmatpush.bf16.msra.mxu0 %v718
    %967 = vmatpush.bf16.msra.mxu0 %v716
    %968 = vmatpush.bf16.msra.mxu0 %v714
    %969 = vmatpush.bf16.msra.mxu0 %v712
    %970 = vmatpush.bf16.msra.mxu0 %v710
    %971 = vmatpush.bf16.msra.mxu0 %v708
    %972 = vmatmul.bf16.gmra.mxu0 %v308
    %v973 = vpop.f32.mrf.mxu0
    %v974 = vadd.f32 %v292, %v973
    %v975 = vpop.f32.mrf.mxu0
    %976 = vdwg.mxu0
    %977 = vmatpush.bf16.msra.mxu0 %v738
    %978 = vmatpush.bf16.msra.mxu0 %v736
    %979 = vmatpush.bf16.msra.mxu0 %v734
    %980 = vmatpush.bf16.msra.mxu0 %v732
    %981 = vmatpush.bf16.msra.mxu0 %v730
    %982 = vmatpush.bf16.msra.mxu0 %v728
    %983 = vmatpush.bf16.msra.mxu0 %v726
    %984 = vmatpush.bf16.msra.mxu0 %v724
    %985 = vmatmul.bf16.gmra.mxu0 %v309
    %v986 = vpop.f32.mrf.mxu0
    %v987 = vadd.f32 %v974, %v986
    %v988 = vpop.f32.mrf.mxu0
    %989 = vdwg.mxu0
    %990 = vmatpush.bf16.msra.mxu0 %v754
    %991 = vmatpush.bf16.msra.mxu0 %v752
    %992 = vmatpush.bf16.msra.mxu0 %v750
    %993 = vmatpush.bf16.msra.mxu0 %v748
    %994 = vmatpush.bf16.msra.mxu0 %v746
    %995 = vmatpush.bf16.msra.mxu0 %v744
    %996 = vmatpush.bf16.msra.mxu0 %v742
    %997 = vmatpush.bf16.msra.mxu0 %v740
    %998 = vmatmul.bf16.gmra.mxu0 %v310
    %v999 = vpop.f32.mrf.mxu0
    %v1000 = vadd.f32 %v987, %v999
    %v1001 = vpop.f32.mrf.mxu0
    %1002 = vdwg.mxu0
    %1003 = vmatpush.bf16.msra.mxu0 %v770
    %1004 = vmatpush.bf16.msra.mxu0 %v768
    %1005 = vmatpush.bf16.msra.mxu0 %v766
    %1006 = vmatpush.bf16.msra.mxu0 %v764
    %1007 = vmatpush.bf16.msra.mxu0 %v762
    %1008 = vmatpush.bf16.msra.mxu0 %v760
    %1009 = vmatpush.bf16.msra.mxu0 %v758
    %1010 = vmatpush.bf16.msra.mxu0 %v756
    %1011 = vmatmul.bf16.gmra.mxu0 %v311
    %v1012 = vpop.f32.mrf.mxu0
    %v1013 = vadd.f32 %v1000, %v1012
    %v1014 = vpop.f32.mrf.mxu0
    %1015 = vdwg.mxu0
    %1016 = vmatpush.bf16.msra.mxu0 %v786
    %1017 = vmatpush.bf16.msra.mxu0 %v784
    %1018 = vmatpush.bf16.msra.mxu0 %v782
    %1019 = vmatpush.bf16.msra.mxu0 %v780
    %1020 = vmatpush.bf16.msra.mxu0 %v778
    %1021 = vmatpush.bf16.msra.mxu0 %v776
    %1022 = vmatpush.bf16.msra.mxu0 %v774
    %1023 = vmatpush.bf16.msra.mxu0 %v772
    %1024 = vmatmul.bf16.gmra.mxu0 %v312
    %v1025 = vpop.f32.mrf.mxu0
    %v1026 = vadd.f32 %v1013, %v1025
    %v1027 = vpop.f32.mrf.mxu0
    %1028 = vdwg.mxu0
    %1029 = vmatpush.bf16.msra.mxu0 %v802
    %1030 = vmatpush.bf16.msra.mxu0 %v800
    %1031 = vmatpush.bf16.msra.mxu0 %v798
    %1032 = vmatpush.bf16.msra.mxu0 %v796
    %1033 = vmatpush.bf16.msra.mxu0 %v794
    %1034 = vmatpush.bf16.msra.mxu0 %v792
    %1035 = vmatpush.bf16.msra.mxu0 %v790
    %1036 = vmatpush.bf16.msra.mxu0 %v788
    %1037 = vmatmul.bf16.gmra.mxu0 %v313
    %v1038 = vpop.f32.mrf.mxu0
    %v1039 = vadd.f32 %v1026, %v1038
    %v1040 = vpop.f32.mrf.mxu0
    %1041 = vdwg.mxu0
    %1042 = vmatpush.bf16.msra.mxu0 %v818
    %1043 = vmatpush.bf16.msra.mxu0 %v816
    %1044 = vmatpush.bf16.msra.mxu0 %v814
    %1045 = vmatpush.bf16.msra.mxu0 %v812
    %1046 = vmatpush.bf16.msra.mxu0 %v810
    %1047 = vmatpush.bf16.msra.mxu0 %v808
    %1048 = vmatpush.bf16.msra.mxu0 %v806
    %1049 = vmatpush.bf16.msra.mxu0 %v804
    %1050 = vmatmul.bf16.gmra.mxu0 %v314
    %v1051 = vpop.f32.mrf.mxu0
    %v1052 = vadd.f32 %v1039, %v1051
    %v1053 = vpop.f32.mrf.mxu0
    %1054 = vdwg.mxu0
    %1055 = vmatpush.bf16.msra.mxu0 %v834
    %1056 = vmatpush.bf16.msra.mxu0 %v832
    %1057 = vmatpush.bf16.msra.mxu0 %v830
    %1058 = vmatpush.bf16.msra.mxu0 %v828
    %1059 = vmatpush.bf16.msra.mxu0 %v826
    %1060 = vmatpush.bf16.msra.mxu0 %v824
    %1061 = vmatpush.bf16.msra.mxu0 %v822
    %1062 = vmatpush.bf16.msra.mxu0 %v820
    %1063 = vmatmul.bf16.gmra.mxu0 %v315
    %v1064 = vpop.f32.mrf.mxu0
    %v1065 = vadd.f32 %v1052, %v1064
    %v1066 = vpop.f32.mrf.mxu0
    %1067 = vdwg.mxu0
    %1068 = vmatpush.bf16.msra.mxu0 %v723
    %1069 = vmatpush.bf16.msra.mxu0 %v721
    %1070 = vmatpush.bf16.msra.mxu0 %v719
    %1071 = vmatpush.bf16.msra.mxu0 %v717
    %1072 = vmatpush.bf16.msra.mxu0 %v715
    %1073 = vmatpush.bf16.msra.mxu0 %v713
    %1074 = vmatpush.bf16.msra.mxu0 %v711
    %1075 = vmatpush.bf16.msra.mxu0 %v709
    %1076 = vmatmul.bf16.gmra.mxu0 %v308
    %v1077 = vpop.f32.mrf.mxu0
    %v1078 = vadd.f32 %v293, %v1077
    %v1079 = vpop.f32.mrf.mxu0
    %1080 = vdwg.mxu0
    %1081 = vmatpush.bf16.msra.mxu0 %v739
    %1082 = vmatpush.bf16.msra.mxu0 %v737
    %1083 = vmatpush.bf16.msra.mxu0 %v735
    %1084 = vmatpush.bf16.msra.mxu0 %v733
    %1085 = vmatpush.bf16.msra.mxu0 %v731
    %1086 = vmatpush.bf16.msra.mxu0 %v729
    %1087 = vmatpush.bf16.msra.mxu0 %v727
    %1088 = vmatpush.bf16.msra.mxu0 %v725
    %1089 = vmatmul.bf16.gmra.mxu0 %v309
    %v1090 = vpop.f32.mrf.mxu0
    %v1091 = vadd.f32 %v1078, %v1090
    %v1092 = vpop.f32.mrf.mxu0
    %1093 = vdwg.mxu0
    %1094 = vmatpush.bf16.msra.mxu0 %v755
    %1095 = vmatpush.bf16.msra.mxu0 %v753
    %1096 = vmatpush.bf16.msra.mxu0 %v751
    %1097 = vmatpush.bf16.msra.mxu0 %v749
    %1098 = vmatpush.bf16.msra.mxu0 %v747
    %1099 = vmatpush.bf16.msra.mxu0 %v745
    %1100 = vmatpush.bf16.msra.mxu0 %v743
    %1101 = vmatpush.bf16.msra.mxu0 %v741
    %1102 = vmatmul.bf16.gmra.mxu0 %v310
    %v1103 = vpop.f32.mrf.mxu0
    %v1104 = vadd.f32 %v1091, %v1103
    %v1105 = vpop.f32.mrf.mxu0
    %1106 = vdwg.mxu0
    %1107 = vmatpush.bf16.msra.mxu0 %v771
    %1108 = vmatpush.bf16.msra.mxu0 %v769
    %1109 = vmatpush.bf16.msra.mxu0 %v767
    %1110 = vmatpush.bf16.msra.mxu0 %v765
    %1111 = vmatpush.bf16.msra.mxu0 %v763
    %1112 = vmatpush.bf16.msra.mxu0 %v761
    %1113 = vmatpush.bf16.msra.mxu0 %v759
    %1114 = vmatpush.bf16.msra.mxu0 %v757
    %1115 = vmatmul.bf16.gmra.mxu0 %v311
    %v1116 = vpop.f32.mrf.mxu0
    %v1117 = vadd.f32 %v1104, %v1116
    %v1118 = vpop.f32.mrf.mxu0
    %1119 = vdwg.mxu0
    %1120 = vmatpush.bf16.msra.mxu0 %v787
    %1121 = vmatpush.bf16.msra.mxu0 %v785
    %1122 = vmatpush.bf16.msra.mxu0 %v783
    %1123 = vmatpush.bf16.msra.mxu0 %v781
    %1124 = vmatpush.bf16.msra.mxu0 %v779
    %1125 = vmatpush.bf16.msra.mxu0 %v777
    %1126 = vmatpush.bf16.msra.mxu0 %v775
    %1127 = vmatpush.bf16.msra.mxu0 %v773
    %1128 = vmatmul.bf16.gmra.mxu0 %v312
    %v1129 = vpop.f32.mrf.mxu0
    %v1130 = vadd.f32 %v1117, %v1129
    %v1131 = vpop.f32.mrf.mxu0
    %1132 = vdwg.mxu0
    %1133 = vmatpush.bf16.msra.mxu0 %v803
    %1134 = vmatpush.bf16.msra.mxu0 %v801
    %1135 = vmatpush.bf16.msra.mxu0 %v799
    %1136 = vmatpush.bf16.msra.mxu0 %v797
    %1137 = vmatpush.bf16.msra.mxu0 %v795
    %1138 = vmatpush.bf16.msra.mxu0 %v793
    %1139 = vmatpush.bf16.msra.mxu0 %v791
    %1140 = vmatpush.bf16.msra.mxu0 %v789
    %1141 = vmatmul.bf16.gmra.mxu0 %v313
    %v1142 = vpop.f32.mrf.mxu0
    %v1143 = vadd.f32 %v1130, %v1142
    %v1144 = vpop.f32.mrf.mxu0
    %1145 = vdwg.mxu0
    %1146 = vmatpush.bf16.msra.mxu0 %v819
    %1147 = vmatpush.bf16.msra.mxu0 %v817
    %1148 = vmatpush.bf16.msra.mxu0 %v815
    %1149 = vmatpush.bf16.msra.mxu0 %v813
    %1150 = vmatpush.bf16.msra.mxu0 %v811
    %1151 = vmatpush.bf16.msra.mxu0 %v809
    %1152 = vmatpush.bf16.msra.mxu0 %v807
    %1153 = vmatpush.bf16.msra.mxu0 %v805
    %1154 = vmatmul.bf16.gmra.mxu0 %v314
    %v1155 = vpop.f32.mrf.mxu0
    %v1156 = vadd.f32 %v1143, %v1155
    %v1157 = vpop.f32.mrf.mxu0
    %1158 = vdwg.mxu0
    %1159 = vmatpush.bf16.msra.mxu0 %v835
    %1160 = vmatpush.bf16.msra.mxu0 %v833
    %1161 = vmatpush.bf16.msra.mxu0 %v831
    %1162 = vmatpush.bf16.msra.mxu0 %v829
    %1163 = vmatpush.bf16.msra.mxu0 %v827
    %1164 = vmatpush.bf16.msra.mxu0 %v825
    %1165 = vmatpush.bf16.msra.mxu0 %v823
    %1166 = vmatpush.bf16.msra.mxu0 %v821
    %1167 = vmatmul.bf16.gmra.mxu0 %v315
    %v1168 = vpop.f32.mrf.mxu0
    %v1169 = vadd.f32 %v1156, %v1168
    %v1170 = vpop.f32.mrf.mxu0
    %1171 = vdwg.mxu0
    %v1172 = vmax.f32 %v1065, 0.0
    %v1173 = vmax.f32 %v1169, 0.0
    %v1174 = vpack.c.bf16 %v1172, %v1172
    %v1175 = vpack.c.bf16 %v1173, %v1173
    %v1177 = vperm.slane %v249, 0
    %v1211 = vunpack.c.l.b16 %v217
    %v1212 = vunpack.c.l.b16 %v218
    %v1213 = vunpack.c.l.b16 %v219
    %v1214 = vunpack.c.l.b16 %v220
    %v1215 = vunpack.c.l.b16 %v221
    %v1216 = vunpack.c.l.b16 %v222
    %v1217 = vunpack.c.l.b16 %v223
    %v1218 = vunpack.c.l.b16 %v224
    %v1219 = vunpack.c.l.b16 %v225
    %v1220 = vunpack.c.l.b16 %v226
    %v1221 = vunpack.c.l.b16 %v227
    %v1222 = vunpack.c.l.b16 %v228
    %v1223 = vunpack.c.l.b16 %v229
    %v1224 = vunpack.c.l.b16 %v230
    %v1225 = vunpack.c.l.b16 %v231
    %v1226 = vunpack.c.l.b16 %v232
    %v1227 = vunpack.c.l.b16 %v233
    %v1228 = vunpack.c.l.b16 %v234
    %v1229 = vunpack.c.l.b16 %v235
    %v1230 = vunpack.c.l.b16 %v236
    %v1231 = vunpack.c.l.b16 %v237
    %v1232 = vunpack.c.l.b16 %v238
    %v1233 = vunpack.c.l.b16 %v239
    %v1234 = vunpack.c.l.b16 %v240
    %v1235 = vunpack.c.l.b16 %v241
    %v1236 = vunpack.c.l.b16 %v242
    %v1237 = vunpack.c.l.b16 %v243
    %v1238 = vunpack.c.l.b16 %v244
    %v1239 = vunpack.c.l.b16 %v245
    %v1240 = vunpack.c.l.b16 %v246
    %v1241 = vunpack.c.l.b16 %v247
    %v1242 = vunpack.c.l.b16 %v248
    %v1243 = vpack.c.b16 %v1212, %v1211
    %v1244 = vpack.c.b16 %v1214, %v1213
    %v1245 = vpack.c.b16 %v1216, %v1215
    %v1246 = vpack.c.b16 %v1218, %v1217
    %v1247 = vpack.c.b16 %v1220, %v1219
    %v1248 = vpack.c.b16 %v1222, %v1221
    %v1249 = vpack.c.b16 %v1224, %v1223
    %v1250 = vpack.c.b16 %v1226, %v1225
    %v1251 = vpack.c.b16 %v1228, %v1227
    %v1252 = vpack.c.b16 %v1230, %v1229
    %v1253 = vpack.c.b16 %v1232, %v1231
    %v1254 = vpack.c.b16 %v1234, %v1233
    %v1255 = vpack.c.b16 %v1236, %v1235
    %v1256 = vpack.c.b16 %v1238, %v1237
    %v1257 = vpack.c.b16 %v1240, %v1239
    %v1258 = vpack.c.b16 %v1242, %v1241
    %1275 = vmatpush.bf16.msra.mxu0 %v1250
    %1276 = vmatpush.bf16.msra.mxu0 %v1249
    %1277 = vmatpush.bf16.msra.mxu0 %v1248
    %1278 = vmatpush.bf16.msra.mxu0 %v1247
    %1279 = vmatpush.bf16.msra.mxu0 %v1246
    %1280 = vmatpush.bf16.msra.mxu0 %v1245
    %1281 = vmatpush.bf16.msra.mxu0 %v1244
    %1282 = vmatpush.bf16.msra.mxu0 %v1243
    %1283 = vmatmul.bf16.gmra.mxu0 %v1174
    %v1284 = vpop.f32.mrf.mxu0
    %v1285 = vadd.f32 %v1177, %v1284
    %v1286 = vpop.f32.mrf.mxu0
    %1287 = vdwg.mxu0
    %1288 = vmatpush.bf16.msra.mxu0 %v1258
    %1289 = vmatpush.bf16.msra.mxu0 %v1257
    %1290 = vmatpush.bf16.msra.mxu0 %v1256
    %1291 = vmatpush.bf16.msra.mxu0 %v1255
    %1292 = vmatpush.bf16.msra.mxu0 %v1254
    %1293 = vmatpush.bf16.msra.mxu0 %v1253
    %1294 = vmatpush.bf16.msra.mxu0 %v1252
    %1295 = vmatpush.bf16.msra.mxu0 %v1251
    %1296 = vmatmul.bf16.gmra.mxu0 %v1175
    %v1297 = vpop.f32.mrf.mxu0
    %v1298 = vadd.f32 %v1285, %v1297
    %v1299 = vpop.f32.mrf.mxu0
    %1300 = vdwg.mxu0
    %v1301 = vmax.f32 %v1298, 0.0
    %v1303 = vperm.slane %v251, 0
    %vm1305 = vcmask 64512
    %v1307 = vsel %vm1305, %v87, 0
    %1309 = vmatpush.msra.mxu0 0.0
    %1310 = vmatpush.msra.mxu0 0.0
    %1311 = vmatpush.msra.mxu0 0.0
    %1312 = vmatpush.msra.mxu0 0.0
    %1313 = vmatpush.msra.mxu0 0.0
    %1314 = vmatpush.msra.mxu0 0.0
    %1315 = vmatpush.msra.mxu0 0.0
    %1316 = vmatpush.msra.mxu0 0.0
    %1317 = vmatpush.msra.mxu0 0.0
    %1318 = vmatpush.msra.mxu0 0.0
    %1319 = vmatpush.msra.mxu0 0.0
    %1320 = vmatpush.msra.mxu0 0.0
    %1321 = vmatpush.msra.mxu0 0.0
    %1322 = vmatpush.msra.mxu0 0.0
    %1323 = vmatpush.msra.mxu0 0.0
    %1324 = vmatpush.msra.mxu0 %v250
    %1325 = vmatmul.f32.gmra.mxu0 %v1307
    %v1326 = vpop.f32.mrf.mxu0
    %v1327 = vadd.f32 %v1303, %v1326
    %1328 = vdwg.mxu0
    %v1329 = vmax.f32 %v1327, 0.0
    %v1331 = vperm.slane %v260, 0
    %vm1333 = vcmask 523264
    %v1335 = vsel %vm1333, %v1329, 0
    %1337 = vmatpush.msra.mxu0 0.0
    %1338 = vmatpush.msra.mxu0 0.0
    %1339 = vmatpush.msra.mxu0 0.0
    %1340 = vmatpush.msra.mxu0 0.0
    %1341 = vmatpush.msra.mxu0 0.0
    %1342 = vmatpush.msra.mxu0 0.0
    %1343 = vmatpush.msra.mxu0 0.0
    %1344 = vmatpush.msra.mxu0 0.0
    %1345 = vmatpush.msra.mxu0 %v259
    %1346 = vmatpush.msra.mxu0 %v258
    %1347 = vmatpush.msra.mxu0 %v257
    %1348 = vmatpush.msra.mxu0 %v256
    %1349 = vmatpush.msra.mxu0 %v255
    %1350 = vmatpush.msra.mxu0 %v254
    %1351 = vmatpush.msra.mxu0 %v253
    %1352 = vmatpush.msra.mxu0 %v252
    %1353 = vmatmul.f32.gmra.mxu0 %v1335
    %v1354 = vpop.f32.mrf.mxu0
    %v1355 = vadd.f32 %v1331, %v1354
    %1356 = vdwg.mxu0
    %v1357 = vmax.f32 %v1355, 0.0
    %vm1358 = vcmask 261120
    %v1360 = vsel %vm1358, %v1357, 0
    %1362 = vmatpush.msra.mxu0 0.0
    %1363 = vmatpush.msra.mxu0 0.0
    %1364 = vmatpush.msra.mxu0 0.0
    %1365 = vmatpush.msra.mxu0 0.0
    %1366 = vmatpush.msra.mxu0 0.0
    %1367 = vmatpush.msra.mxu0 0.0
    %1368 = vmatpush.msra.mxu0 0.0
    %1369 = vmatpush.msra.mxu0 0.0
    %1370 = vmatpush.msra.mxu0 0.0
    %1371 = vmatpush.msra.mxu0 0.0
    %1372 = vmatpush.msra.mxu0 0.0
    %1373 = vmatpush.msra.mxu0 0.0
    %1374 = vmatpush.msra.mxu0 %v280
    %1375 = vmatpush.msra.mxu0 %v279
    %1376 = vmatpush.msra.mxu0 %v278
    %1377 = vmatpush.msra.mxu0 %v277
    %1378 = vmatmul.f32.gmra.mxu0 %v1360
    %v1379 = vpop.f32.mrf.mxu0
    %v1380 = vadd.f32 0.0, %v1379
    %1381 = vdwg.mxu0
    %1382 = vmatpush.msra.mxu0 %v276
    %1383 = vmatpush.msra.mxu0 %v275
    %1384 = vmatpush.msra.mxu0 %v274
    %1385 = vmatpush.msra.mxu0 %v273
    %1386 = vmatpush.msra.mxu0 %v272
    %1387 = vmatpush.msra.mxu0 %v271
    %1388 = vmatpush.msra.mxu0 %v270
    %1389 = vmatpush.msra.mxu0 %v269
    %1390 = vmatpush.msra.mxu0 %v268
    %1391 = vmatpush.msra.mxu0 %v267
    %1392 = vmatpush.msra.mxu0 %v266
    %1393 = vmatpush.msra.mxu0 %v265
    %1394 = vmatpush.msra.mxu0 %v264
    %1395 = vmatpush.msra.mxu0 %v263
    %1396 = vmatpush.msra.mxu0 %v262
    %1397 = vmatpush.msra.mxu0 %v261
    %1398 = vmatmul.f32.gmra.mxu0 %v1301
    %v1399 = vpop.f32.mrf.mxu0
    %v1400 = vadd.f32 %v1380, %v1399
    %1401 = vdwg.mxu0
    %v1403 = vperm.slane %v281, 0
    %v1405 = vadd.f32 %v1400, %v1403
    %v1406 = vmax.f32 %v1405, 0.0
    %v1408 = vperm.slane %v290, 0
    %v1411 = vsel %vm1333, %v1406, 0
    %1413 = vmatpush.msra.mxu0 0.0
    %1414 = vmatpush.msra.mxu0 0.0
    %1415 = vmatpush.msra.mxu0 0.0
    %1416 = vmatpush.msra.mxu0 0.0
    %1417 = vmatpush.msra.mxu0 0.0
    %1418 = vmatpush.msra.mxu0 0.0
    %1419 = vmatpush.msra.mxu0 0.0
    %1420 = vmatpush.msra.mxu0 0.0
    %1421 = vmatpush.msra.mxu0 %v289
    %1422 = vmatpush.msra.mxu0 %v288
    %1423 = vmatpush.msra.mxu0 %v287
    %1424 = vmatpush.msra.mxu0 %v286
    %1425 = vmatpush.msra.mxu0 %v285
    %1426 = vmatpush.msra.mxu0 %v284
    %1427 = vmatpush.msra.mxu0 %v283
    %1428 = vmatpush.msra.mxu0 %v282
    %1429 = vmatmul.f32.gmra.mxu0 %v1411
    %v1430 = vpop.f32.mrf.mxu0
    %v1431 = vadd.f32 %v1408, %v1430
    %1432 = vdwg.mxu0
    %v1433 = vmax.f32 %v1431, 0.0
    %v1434 = vld [vmem:[%s15] sm:$0xff]
    %v1435 = vld [vmem:[%s15 + $0x8] sm:$0xff]
    %v1436 = vld [vmem:[%s15 + $0x10] sm:$0xff]
    %v1437 = vld [vmem:[%s15 + $0x18] sm:$0xff]
    %v1438 = vld [vmem:[%s15 + $0x20] sm:$0xff]
    %v1439 = vld [vmem:[%s15 + $0x28] sm:$0xff]
    %v1440 = vld [vmem:[%s15 + $0x30] sm:$0xff]
    %v1441 = vld [vmem:[%s15 + $0x38] sm:$0xff]
    %v1442 = vld [vmem:[%s15 + $0x40] sm:$0xff]
    %v1443 = vld [vmem:[%s15 + $0x48] sm:$0xff]
    %v1444 = vld [vmem:[%s15 + $0x50] sm:$0xff]
    %v1445 = vld [vmem:[%s15 + $0x58] sm:$0xff]
    %v1446 = vld [vmem:[%s15 + $0x60] sm:$0xff]
    %v1447 = vld [vmem:[%s15 + $0x68] sm:$0xff]
    %v1448 = vld [vmem:[%s15 + $0x70] sm:$0xff]
    %v1449 = vld [vmem:[%s15 + $0x78] sm:$0xff]
    %v1451 = vsel %vm1358, %v1433, 0
    %1453 = vmatpush.msra.mxu0 0.0
    %1454 = vmatpush.msra.mxu0 0.0
    %1455 = vmatpush.msra.mxu0 0.0
    %1456 = vmatpush.msra.mxu0 0.0
    %1457 = vmatpush.msra.mxu0 0.0
    %1458 = vmatpush.msra.mxu0 0.0
    %1459 = vmatpush.msra.mxu0 0.0
    %1460 = vmatpush.msra.mxu0 0.0
    %1461 = vmatpush.msra.mxu0 0.0
    %1462 = vmatpush.msra.mxu0 0.0
    %1463 = vmatpush.msra.mxu0 0.0
    %1464 = vmatpush.msra.mxu0 0.0
    %1465 = vmatpush.msra.mxu0 %v1446
    %1466 = vmatpush.msra.mxu0 %v1442
    %1467 = vmatpush.msra.mxu0 %v1438
    %1468 = vmatpush.msra.mxu0 %v1434
    %1469 = vmatmul.f32.gmra.mxu0 %v1451
    %v1470 = vpop.f32.mrf.mxu0
    %v1471 = vadd.f32 0.0, %v1470
    %1472 = vdwg.mxu0
    %1473 = vmatpush.msra.mxu0 0.0
    %1474 = vmatpush.msra.mxu0 0.0
    %1475 = vmatpush.msra.mxu0 0.0
    %1476 = vmatpush.msra.mxu0 0.0
    %1477 = vmatpush.msra.mxu0 0.0
    %1478 = vmatpush.msra.mxu0 0.0
    %1479 = vmatpush.msra.mxu0 0.0
    %1480 = vmatpush.msra.mxu0 0.0
    %1481 = vmatpush.msra.mxu0 0.0
    %1482 = vmatpush.msra.mxu0 0.0
    %1483 = vmatpush.msra.mxu0 0.0
    %1484 = vmatpush.msra.mxu0 0.0
    %1485 = vmatpush.msra.mxu0 %v1447
    %1486 = vmatpush.msra.mxu0 %v1443
    %1487 = vmatpush.msra.mxu0 %v1439
    %1488 = vmatpush.msra.mxu0 %v1435
    %1489 = vmatmul.f32.gmra.mxu0 %v1451
    %v1490 = vpop.f32.mrf.mxu0
    %v1491 = vadd.f32 0.0, %v1490
    %1492 = vdwg.mxu0
    %1493 = vmatpush.msra.mxu0 0.0
    %1494 = vmatpush.msra.mxu0 0.0
    %1495 = vmatpush.msra.mxu0 0.0
    %1496 = vmatpush.msra.mxu0 0.0
    %1497 = vmatpush.msra.mxu0 0.0
    %1498 = vmatpush.msra.mxu0 0.0
    %1499 = vmatpush.msra.mxu0 0.0
    %1500 = vmatpush.msra.mxu0 0.0
    %1501 = vmatpush.msra.mxu0 0.0
    %1502 = vmatpush.msra.mxu0 0.0
    %1503 = vmatpush.msra.mxu0 0.0
    %1504 = vmatpush.msra.mxu0 0.0
    %1505 = vmatpush.msra.mxu0 %v1448
    %1506 = vmatpush.msra.mxu0 %v1444
    %1507 = vmatpush.msra.mxu0 %v1440
    %1508 = vmatpush.msra.mxu0 %v1436
    %1509 = vmatmul.f32.gmra.mxu0 %v1451
    %v1510 = vpop.f32.mrf.mxu0
    %v1511 = vadd.f32 0.0, %v1510
    %1512 = vdwg.mxu0
    %1513 = vmatpush.msra.mxu0 0.0
    %1514 = vmatpush.msra.mxu0 0.0
    %1515 = vmatpush.msra.mxu0 0.0
    %1516 = vmatpush.msra.mxu0 0.0
    %1517 = vmatpush.msra.mxu0 0.0
    %1518 = vmatpush.msra.mxu0 0.0
    %1519 = vmatpush.msra.mxu0 0.0
    %1520 = vmatpush.msra.mxu0 0.0
    %1521 = vmatpush.msra.mxu0 0.0
    %1522 = vmatpush.msra.mxu0 0.0
    %1523 = vmatpush.msra.mxu0 0.0
    %1524 = vmatpush.msra.mxu0 0.0
    %1525 = vmatpush.msra.mxu0 %v1449
    %1526 = vmatpush.msra.mxu0 %v1445
    %1527 = vmatpush.msra.mxu0 %v1441
    %1528 = vmatpush.msra.mxu0 %v1437
    %1529 = vmatmul.f32.gmra.mxu0 %v1451
    %v1530 = vpop.f32.mrf.mxu0
    %v1531 = vadd.f32 0.0, %v1530
    %1532 = vdwg.mxu0
    %v1533 = vld [vmem:[%s16] sm:$0xff]
    %v1534 = vld [vmem:[%s16 + $0x8] sm:$0xff]
    %v1535 = vld [vmem:[%s16 + $0x10] sm:$0xff]
    %v1536 = vld [vmem:[%s16 + $0x18] sm:$0xff]
    %v1537 = vld [vmem:[%s16 + $0x20] sm:$0xff]
    %v1538 = vld [vmem:[%s16 + $0x28] sm:$0xff]
    %v1539 = vld [vmem:[%s16 + $0x30] sm:$0xff]
    %v1540 = vld [vmem:[%s16 + $0x38] sm:$0xff]
    %v1541 = vld [vmem:[%s16 + $0x40] sm:$0xff]
    %v1542 = vld [vmem:[%s16 + $0x48] sm:$0xff]
    %v1543 = vld [vmem:[%s16 + $0x50] sm:$0xff]
    %v1544 = vld [vmem:[%s16 + $0x58] sm:$0xff]
    %v1545 = vld [vmem:[%s16 + $0x60] sm:$0xff]
    %v1546 = vld [vmem:[%s16 + $0x68] sm:$0xff]
    %v1547 = vld [vmem:[%s16 + $0x70] sm:$0xff]
    %v1548 = vld [vmem:[%s16 + $0x78] sm:$0xff]
    %v1549 = vld [vmem:[%s16 + $0x80] sm:$0xff]
    %v1550 = vld [vmem:[%s16 + $0x88] sm:$0xff]
    %v1551 = vld [vmem:[%s16 + $0x90] sm:$0xff]
    %v1552 = vld [vmem:[%s16 + $0x98] sm:$0xff]
    %v1553 = vld [vmem:[%s16 + $0xa0] sm:$0xff]
    %v1554 = vld [vmem:[%s16 + $0xa8] sm:$0xff]
    %v1555 = vld [vmem:[%s16 + $0xb0] sm:$0xff]
    %v1556 = vld [vmem:[%s16 + $0xb8] sm:$0xff]
    %v1557 = vld [vmem:[%s16 + $0xc0] sm:$0xff]
    %v1558 = vld [vmem:[%s16 + $0xc8] sm:$0xff]
    %v1559 = vld [vmem:[%s16 + $0xd0] sm:$0xff]
    %v1560 = vld [vmem:[%s16 + $0xd8] sm:$0xff]
    %v1561 = vld [vmem:[%s16 + $0xe0] sm:$0xff]
    %v1562 = vld [vmem:[%s16 + $0xe8] sm:$0xff]
    %v1563 = vld [vmem:[%s16 + $0xf0] sm:$0xff]
    %v1564 = vld [vmem:[%s16 + $0xf8] sm:$0xff]
    %v1565 = vld [vmem:[%s16 + $0x100] sm:$0xff]
    %v1566 = vld [vmem:[%s16 + $0x108] sm:$0xff]
    %v1567 = vld [vmem:[%s16 + $0x110] sm:$0xff]
    %v1568 = vld [vmem:[%s16 + $0x118] sm:$0xff]
    %v1569 = vld [vmem:[%s16 + $0x120] sm:$0xff]
    %v1570 = vld [vmem:[%s16 + $0x128] sm:$0xff]
    %v1571 = vld [vmem:[%s16 + $0x130] sm:$0xff]
    %v1572 = vld [vmem:[%s16 + $0x138] sm:$0xff]
    %v1573 = vld [vmem:[%s16 + $0x140] sm:$0xff]
    %v1574 = vld [vmem:[%s16 + $0x148] sm:$0xff]
    %v1575 = vld [vmem:[%s16 + $0x150] sm:$0xff]
    %v1576 = vld [vmem:[%s16 + $0x158] sm:$0xff]
    %v1577 = vld [vmem:[%s16 + $0x160] sm:$0xff]
    %v1578 = vld [vmem:[%s16 + $0x168] sm:$0xff]
    %v1579 = vld [vmem:[%s16 + $0x170] sm:$0xff]
    %v1580 = vld [vmem:[%s16 + $0x178] sm:$0xff]
    %v1581 = vld [vmem:[%s16 + $0x180] sm:$0xff]
    %v1582 = vld [vmem:[%s16 + $0x188] sm:$0xff]
    %v1583 = vld [vmem:[%s16 + $0x190] sm:$0xff]
    %v1584 = vld [vmem:[%s16 + $0x198] sm:$0xff]
    %v1585 = vld [vmem:[%s16 + $0x1a0] sm:$0xff]
    %v1586 = vld [vmem:[%s16 + $0x1a8] sm:$0xff]
    %v1587 = vld [vmem:[%s16 + $0x1b0] sm:$0xff]
    %v1588 = vld [vmem:[%s16 + $0x1b8] sm:$0xff]
    %v1589 = vld [vmem:[%s16 + $0x1c0] sm:$0xff]
    %v1590 = vld [vmem:[%s16 + $0x1c8] sm:$0xff]
    %v1591 = vld [vmem:[%s16 + $0x1d0] sm:$0xff]
    %v1592 = vld [vmem:[%s16 + $0x1d8] sm:$0xff]
    %v1593 = vld [vmem:[%s16 + $0x1e0] sm:$0xff]
    %v1594 = vld [vmem:[%s16 + $0x1e8] sm:$0xff]
    %v1595 = vld [vmem:[%s16 + $0x1f0] sm:$0xff]
    %v1596 = vld [vmem:[%s16 + $0x1f8] sm:$0xff]
    %v1601 = vrot.slane %v1491, 7
    %v1602 = vrot.slane %v1511, 6
    %v1603 = vrot.slane %v1531, 5
    %vm1604 = vcmask 1040384
    %v1605 = vsel %vm1604, %v1471, %v1601
    %vm1606 = vcmask 1042434
    %v1607 = vsel %vm1606, %v1602, %v1603
    %vm1608 = vcmask 1041408
    %v1609 = vsel %vm1608, %v1605, %v1607
    %vm1610 = vcmask 1041409
    %v1611 = vsel %vm1610, %v1471, %v1601
    %vm1612 = vcmask 1043459
    %v1613 = vsel %vm1612, %v1602, %v1603
    %vm1614 = vcmask 1042433
    %v1615 = vsel %vm1614, %v1611, %v1613
    %v1616 = vrot.slane %v1615, 1
    %v1617 = vsel %vm1606, %v1471, %v1601
    %vm1618 = vcmask 1044484
    %v1619 = vsel %vm1618, %v1602, %v1603
    %vm1620 = vcmask 1043458
    %v1621 = vsel %vm1620, %v1617, %v1619
    %v1622 = vrot.slane %v1621, 2
    %v1623 = vsel %vm1612, %v1471, %v1601
    %vm1624 = vcmask 1045509
    %v1625 = vsel %vm1624, %v1602, %v1603
    %vm1626 = vcmask 1044483
    %v1627 = vsel %vm1626, %v1623, %v1625
    %v1628 = vrot.slane %v1627, 3
    %v1629 = vsel %vm1618, %v1471, %v1601
    %vm1630 = vcmask 1046534
    %v1631 = vsel %vm1630, %v1602, %v1603
    %vm1632 = vcmask 1045508
    %v1633 = vsel %vm1632, %v1629, %v1631
    %v1634 = vrot.slane %v1633, 4
    %v1635 = vsel %vm1624, %v1471, %v1601
    %vm1636 = vcmask 1046528
    %v1637 = vsel %vm1636, %v1603, %v1602
    %vm1638 = vcmask 1046533
    %v1639 = vsel %vm1638, %v1635, %v1637
    %v1640 = vrot.slane %v1639, 5
    %v1641 = vsel %vm1630, %v1471, %v1601
    %v1642 = vsel %vm1604, %v1602, %v1603
    %vm1643 = vcmask 1045504
    %v1644 = vsel %vm1643, %v1642, %v1641
    %v1645 = vrot.slane %v1644, 6
    %v1646 = vsel %vm1636, %v1601, %v1471
    %v1647 = vsel %vm1610, %v1602, %v1603
    %vm1648 = vcmask 1046529
    %v1649 = vsel %vm1648, %v1647, %v1646
    %v1650 = vrot.slane %v1649, 7
    %v1651 = vperm.slane %v1609, 0
    %v1652 = vperm.slane %v1609, 1
    %v1653 = vperm.slane %v1609, 2
    %v1654 = vperm.slane %v1609, 3
    %v1655 = vperm.slane %v1616, 0
    %v1656 = vperm.slane %v1616, 1
    %v1657 = vperm.slane %v1616, 2
    %v1658 = vperm.slane %v1616, 3
    %v1659 = vperm.slane %v1622, 0
    %v1660 = vperm.slane %v1622, 1
    %v1661 = vperm.slane %v1622, 2
    %v1662 = vperm.slane %v1622, 3
    %v1663 = vperm.slane %v1628, 0
    %v1664 = vperm.slane %v1628, 1
    %v1665 = vperm.slane %v1628, 2
    %v1666 = vperm.slane %v1628, 3
    %v1667 = vperm.slane %v1634, 0
    %v1668 = vperm.slane %v1634, 1
    %v1669 = vperm.slane %v1634, 2
    %v1670 = vperm.slane %v1634, 3
    %v1671 = vperm.slane %v1640, 0
    %v1672 = vperm.slane %v1640, 1
    %v1673 = vperm.slane %v1640, 2
    %v1674 = vperm.slane %v1640, 3
    %v1675 = vperm.slane %v1645, 0
    %v1676 = vperm.slane %v1645, 1
    %v1677 = vperm.slane %v1645, 2
    %v1678 = vperm.slane %v1645, 3
    %v1679 = vperm.slane %v1650, 0
    %v1680 = vperm.slane %v1650, 1
    %v1681 = vperm.slane %v1650, 2
    %v1682 = vperm.slane %v1650, 3
    %v1715 = vsub.f32 %v1651, %v1471
    %v1716 = vsub.f32 %v1652, %v1491
    %v1717 = vsub.f32 %v1653, %v1511
    %v1718 = vsub.f32 %v1654, %v1531
    %v1719 = vsub.f32 %v1655, %v1471
    %v1720 = vsub.f32 %v1656, %v1491
    %v1721 = vsub.f32 %v1657, %v1511
    %v1722 = vsub.f32 %v1658, %v1531
    %v1723 = vsub.f32 %v1659, %v1471
    %v1724 = vsub.f32 %v1660, %v1491
    %v1725 = vsub.f32 %v1661, %v1511
    %v1726 = vsub.f32 %v1662, %v1531
    %v1727 = vsub.f32 %v1663, %v1471
    %v1728 = vsub.f32 %v1664, %v1491
    %v1729 = vsub.f32 %v1665, %v1511
    %v1730 = vsub.f32 %v1666, %v1531
    %v1731 = vsub.f32 %v1667, %v1471
    %v1732 = vsub.f32 %v1668, %v1491
    %v1733 = vsub.f32 %v1669, %v1511
    %v1734 = vsub.f32 %v1670, %v1531
    %v1735 = vsub.f32 %v1671, %v1471
    %v1736 = vsub.f32 %v1672, %v1491
    %v1737 = vsub.f32 %v1673, %v1511
    %v1738 = vsub.f32 %v1674, %v1531
    %v1739 = vsub.f32 %v1675, %v1471
    %v1740 = vsub.f32 %v1676, %v1491
    %v1741 = vsub.f32 %v1677, %v1511
    %v1742 = vsub.f32 %v1678, %v1531
    %v1743 = vsub.f32 %v1679, %v1471
    %v1744 = vsub.f32 %v1680, %v1491
    %v1745 = vsub.f32 %v1681, %v1511
    %v1746 = vsub.f32 %v1682, %v1531
    %v1747 = vand.u32 2147483647, %v1715
    %v1748 = vand.u32 2147483647, %v1716
    %v1749 = vand.u32 2147483647, %v1717
    %v1750 = vand.u32 2147483647, %v1718
    %v1751 = vand.u32 2147483647, %v1719
    %v1752 = vand.u32 2147483647, %v1720
    %v1753 = vand.u32 2147483647, %v1721
    %v1754 = vand.u32 2147483647, %v1722
    %v1755 = vand.u32 2147483647, %v1723
    %v1756 = vand.u32 2147483647, %v1724
    %v1757 = vand.u32 2147483647, %v1725
    %v1758 = vand.u32 2147483647, %v1726
    %v1759 = vand.u32 2147483647, %v1727
    %v1760 = vand.u32 2147483647, %v1728
    %v1761 = vand.u32 2147483647, %v1729
    %v1762 = vand.u32 2147483647, %v1730
    %v1763 = vand.u32 2147483647, %v1731
    %v1764 = vand.u32 2147483647, %v1732
    %v1765 = vand.u32 2147483647, %v1733
    %v1766 = vand.u32 2147483647, %v1734
    %v1767 = vand.u32 2147483647, %v1735
    %v1768 = vand.u32 2147483647, %v1736
    %v1769 = vand.u32 2147483647, %v1737
    %v1770 = vand.u32 2147483647, %v1738
    %v1771 = vand.u32 2147483647, %v1739
    %v1772 = vand.u32 2147483647, %v1740
    %v1773 = vand.u32 2147483647, %v1741
    %v1774 = vand.u32 2147483647, %v1742
    %v1775 = vand.u32 2147483647, %v1743
    %v1776 = vand.u32 2147483647, %v1744
    %v1777 = vand.u32 2147483647, %v1745
    %v1778 = vand.u32 2147483647, %v1746
    %1779 = vmatpush.msra.mxu0 %v1548
    %1780 = vmatpush.msra.mxu0 %v1547
    %1781 = vmatpush.msra.mxu0 %v1546
    %1782 = vmatpush.msra.mxu0 %v1545
    %1783 = vmatpush.msra.mxu0 %v1544
    %1784 = vmatpush.msra.mxu0 %v1543
    %1785 = vmatpush.msra.mxu0 %v1542
    %1786 = vmatpush.msra.mxu0 %v1541
    %1787 = vmatpush.msra.mxu0 %v1540
    %1788 = vmatpush.msra.mxu0 %v1539
    %1789 = vmatpush.msra.mxu0 %v1538
    %1790 = vmatpush.msra.mxu0 %v1537
    %1791 = vmatpush.msra.mxu0 %v1536
    %1792 = vmatpush.msra.mxu0 %v1535
    %1793 = vmatpush.msra.mxu0 %v1534
    %1794 = vmatpush.msra.mxu0 %v1533
    %1795 = vmatmul.f32.gmra.mxu0 %v1747
    %v1796 = vpop.f32.mrf.mxu0
    %v1797 = vadd.f32 0.0, %v1796
    %1798 = vmatmul.f32.gmra.mxu0 %v1751
    %v1799 = vpop.f32.mrf.mxu0
    %v1800 = vadd.f32 0.0, %v1799
    %1801 = vmatmul.f32.gmra.mxu0 %v1755
    %v1802 = vpop.f32.mrf.mxu0
    %v1803 = vadd.f32 0.0, %v1802
    %1804 = vmatmul.f32.gmra.mxu0 %v1759
    %v1805 = vpop.f32.mrf.mxu0
    %v1806 = vadd.f32 0.0, %v1805
    %1807 = vmatmul.f32.gmra.mxu0 %v1763
    %v1808 = vpop.f32.mrf.mxu0
    %v1809 = vadd.f32 0.0, %v1808
    %1810 = vmatmul.f32.gmra.mxu0 %v1767
    %v1811 = vpop.f32.mrf.mxu0
    %v1812 = vadd.f32 0.0, %v1811
    %1813 = vmatmul.f32.gmra.mxu0 %v1771
    %v1814 = vpop.f32.mrf.mxu0
    %v1815 = vadd.f32 0.0, %v1814
    %1816 = vmatmul.f32.gmra.mxu0 %v1775
    %v1817 = vpop.f32.mrf.mxu0
    %v1818 = vadd.f32 0.0, %v1817
    %1819 = vdwg.mxu0
    %1820 = vmatpush.msra.mxu0 %v1564
    %1821 = vmatpush.msra.mxu0 %v1563
    %1822 = vmatpush.msra.mxu0 %v1562
    %1823 = vmatpush.msra.mxu0 %v1561
    %1824 = vmatpush.msra.mxu0 %v1560
    %1825 = vmatpush.msra.mxu0 %v1559
    %1826 = vmatpush.msra.mxu0 %v1558
    %1827 = vmatpush.msra.mxu0 %v1557
    %1828 = vmatpush.msra.mxu0 %v1556
    %1829 = vmatpush.msra.mxu0 %v1555
    %1830 = vmatpush.msra.mxu0 %v1554
    %1831 = vmatpush.msra.mxu0 %v1553
    %1832 = vmatpush.msra.mxu0 %v1552
    %1833 = vmatpush.msra.mxu0 %v1551
    %1834 = vmatpush.msra.mxu0 %v1550
    %1835 = vmatpush.msra.mxu0 %v1549
    %1836 = vmatmul.f32.gmra.mxu0 %v1748
    %v1837 = vpop.f32.mrf.mxu0
    %v1838 = vadd.f32 %v1797, %v1837
    %1839 = vmatmul.f32.gmra.mxu0 %v1752
    %v1840 = vpop.f32.mrf.mxu0
    %v1841 = vadd.f32 %v1800, %v1840
    %1842 = vmatmul.f32.gmra.mxu0 %v1756
    %v1843 = vpop.f32.mrf.mxu0
    %v1844 = vadd.f32 %v1803, %v1843
    %1845 = vmatmul.f32.gmra.mxu0 %v1760
    %v1846 = vpop.f32.mrf.mxu0
    %v1847 = vadd.f32 %v1806, %v1846
    %1848 = vmatmul.f32.gmra.mxu0 %v1764
    %v1849 = vpop.f32.mrf.mxu0
    %v1850 = vadd.f32 %v1809, %v1849
    %1851 = vmatmul.f32.gmra.mxu0 %v1768
    %v1852 = vpop.f32.mrf.mxu0
    %v1853 = vadd.f32 %v1812, %v1852
    %1854 = vmatmul.f32.gmra.mxu0 %v1772
    %v1855 = vpop.f32.mrf.mxu0
    %v1856 = vadd.f32 %v1815, %v1855
    %1857 = vmatmul.f32.gmra.mxu0 %v1776
    %v1858 = vpop.f32.mrf.mxu0
    %v1859 = vadd.f32 %v1818, %v1858
    %1860 = vdwg.mxu0
    %1861 = vmatpush.msra.mxu0 %v1580
    %1862 = vmatpush.msra.mxu0 %v1579
    %1863 = vmatpush.msra.mxu0 %v1578
    %1864 = vmatpush.msra.mxu0 %v1577
    %1865 = vmatpush.msra.mxu0 %v1576
    %1866 = vmatpush.msra.mxu0 %v1575
    %1867 = vmatpush.msra.mxu0 %v1574
    %1868 = vmatpush.msra.mxu0 %v1573
    %1869 = vmatpush.msra.mxu0 %v1572
    %1870 = vmatpush.msra.mxu0 %v1571
    %1871 = vmatpush.msra.mxu0 %v1570
    %1872 = vmatpush.msra.mxu0 %v1569
    %1873 = vmatpush.msra.mxu0 %v1568
    %1874 = vmatpush.msra.mxu0 %v1567
    %1875 = vmatpush.msra.mxu0 %v1566
    %1876 = vmatpush.msra.mxu0 %v1565
    %1877 = vmatmul.f32.gmra.mxu0 %v1749
    %v1878 = vpop.f32.mrf.mxu0
    %v1879 = vadd.f32 %v1838, %v1878
    %1880 = vmatmul.f32.gmra.mxu0 %v1753
    %v1881 = vpop.f32.mrf.mxu0
    %v1882 = vadd.f32 %v1841, %v1881
    %1883 = vmatmul.f32.gmra.mxu0 %v1757
    %v1884 = vpop.f32.mrf.mxu0
    %v1885 = vadd.f32 %v1844, %v1884
    %1886 = vmatmul.f32.gmra.mxu0 %v1761
    %v1887 = vpop.f32.mrf.mxu0
    %v1888 = vadd.f32 %v1847, %v1887
    %1889 = vmatmul.f32.gmra.mxu0 %v1765
    %v1890 = vpop.f32.mrf.mxu0
    %v1891 = vadd.f32 %v1850, %v1890
    %1892 = vmatmul.f32.gmra.mxu0 %v1769
    %v1893 = vpop.f32.mrf.mxu0
    %v1894 = vadd.f32 %v1853, %v1893
    %1895 = vmatmul.f32.gmra.mxu0 %v1773
    %v1896 = vpop.f32.mrf.mxu0
    %v1897 = vadd.f32 %v1856, %v1896
    %1898 = vmatmul.f32.gmra.mxu0 %v1777
    %v1899 = vpop.f32.mrf.mxu0
    %v1900 = vadd.f32 %v1859, %v1899
    %1901 = vdwg.mxu0
    %1902 = vmatpush.msra.mxu0 %v1596
    %1903 = vmatpush.msra.mxu0 %v1595
    %1904 = vmatpush.msra.mxu0 %v1594
    %1905 = vmatpush.msra.mxu0 %v1593
    %1906 = vmatpush.msra.mxu0 %v1592
    %1907 = vmatpush.msra.mxu0 %v1591
    %1908 = vmatpush.msra.mxu0 %v1590
    %1909 = vmatpush.msra.mxu0 %v1589
    %1910 = vmatpush.msra.mxu0 %v1588
    %1911 = vmatpush.msra.mxu0 %v1587
    %1912 = vmatpush.msra.mxu0 %v1586
    %1913 = vmatpush.msra.mxu0 %v1585
    %1914 = vmatpush.msra.mxu0 %v1584
    %1915 = vmatpush.msra.mxu0 %v1583
    %1916 = vmatpush.msra.mxu0 %v1582
    %1917 = vmatpush.msra.mxu0 %v1581
    %1918 = vmatmul.f32.gmra.mxu0 %v1750
    %v1919 = vpop.f32.mrf.mxu0
    %v1920 = vadd.f32 %v1879, %v1919
    %1921 = vmatmul.f32.gmra.mxu0 %v1754
    %v1922 = vpop.f32.mrf.mxu0
    %v1923 = vadd.f32 %v1882, %v1922
    %1924 = vmatmul.f32.gmra.mxu0 %v1758
    %v1925 = vpop.f32.mrf.mxu0
    %v1926 = vadd.f32 %v1885, %v1925
    %1927 = vmatmul.f32.gmra.mxu0 %v1762
    %v1928 = vpop.f32.mrf.mxu0
    %v1929 = vadd.f32 %v1888, %v1928
    %1930 = vmatmul.f32.gmra.mxu0 %v1766
    %v1931 = vpop.f32.mrf.mxu0
    %v1932 = vadd.f32 %v1891, %v1931
    %1933 = vmatmul.f32.gmra.mxu0 %v1770
    %v1934 = vpop.f32.mrf.mxu0
    %v1935 = vadd.f32 %v1894, %v1934
    %1936 = vmatmul.f32.gmra.mxu0 %v1774
    %v1937 = vpop.f32.mrf.mxu0
    %v1938 = vadd.f32 %v1897, %v1937
    %1939 = vmatmul.f32.gmra.mxu0 %v1778
    %v1940 = vpop.f32.mrf.mxu0
    %v1941 = vadd.f32 %v1900, %v1940
    %1942 = vdwg.mxu0
    %v1943 = vsub.f32 0.0, %v1920
    %v1944 = vsub.f32 0.0, %v1923
    %v1945 = vsub.f32 0.0, %v1926
    %v1946 = vsub.f32 0.0, %v1929
    %v1947 = vsub.f32 0.0, %v1932
    %v1948 = vsub.f32 0.0, %v1935
    %v1949 = vsub.f32 0.0, %v1938
    %v1950 = vsub.f32 0.0, %v1941
    %v1951 = vmul.f32 %v1943, 1.442695
    %v1952 = vpow.pop %v1951
    %v1953 = vmul.f32 %v1944, 1.442695
    %v1954 = vpow.pop %v1953
    %v1955 = vmul.f32 %v1945, 1.442695
    %v1956 = vpow.pop %v1955
    %v1957 = vmul.f32 %v1946, 1.442695
    %v1958 = vpow.pop %v1957
    %v1959 = vmul.f32 %v1947, 1.442695
    %v1960 = vpow.pop %v1959
    %v1961 = vmul.f32 %v1948, 1.442695
    %v1962 = vpow.pop %v1961
    %v1963 = vmul.f32 %v1949, 1.442695
    %v1964 = vpow.pop %v1963
    %v1965 = vmul.f32 %v1950, 1.442695
    %v1966 = vpow.pop %v1965
    %v1967 = vsel %vm1358, %v1952, 0.0
    %v1968 = vrot.slane %v1967, 4
    %v1969 = vadd.f32 %v1967, %v1968
    %v1970 = vrot.slane %v1969, 2
    %v1971 = vadd.f32 %v1969, %v1970
    %v1972 = vrot.slane %v1971, 1
    %v1973 = vadd.f32 %v1971, %v1972
    %v1974 = vsel %vm1358, %v1954, 0.0
    %v1975 = vrot.slane %v1974, 4
    %v1976 = vadd.f32 %v1974, %v1975
    %v1977 = vrot.slane %v1976, 2
    %v1978 = vadd.f32 %v1976, %v1977
    %v1979 = vrot.slane %v1978, 1
    %v1980 = vadd.f32 %v1978, %v1979
    %v1981 = vsel %vm1358, %v1956, 0.0
    %v1982 = vrot.slane %v1981, 4
    %v1983 = vadd.f32 %v1981, %v1982
    %v1984 = vrot.slane %v1983, 2
    %v1985 = vadd.f32 %v1983, %v1984
    %v1986 = vrot.slane %v1985, 1
    %v1987 = vadd.f32 %v1985, %v1986
    %v1988 = vsel %vm1358, %v1958, 0.0
    %v1989 = vrot.slane %v1988, 4
    %v1990 = vadd.f32 %v1988, %v1989
    %v1991 = vrot.slane %v1990, 2
    %v1992 = vadd.f32 %v1990, %v1991
    %v1993 = vrot.slane %v1992, 1
    %v1994 = vadd.f32 %v1992, %v1993
    %v1995 = vsel %vm1358, %v1960, 0.0
    %v1996 = vrot.slane %v1995, 4
    %v1997 = vadd.f32 %v1995, %v1996
    %v1998 = vrot.slane %v1997, 2
    %v1999 = vadd.f32 %v1997, %v1998
    %v2000 = vrot.slane %v1999, 1
    %v2001 = vadd.f32 %v1999, %v2000
    %v2002 = vsel %vm1358, %v1962, 0.0
    %v2003 = vrot.slane %v2002, 4
    %v2004 = vadd.f32 %v2002, %v2003
    %v2005 = vrot.slane %v2004, 2
    %v2006 = vadd.f32 %v2004, %v2005
    %v2007 = vrot.slane %v2006, 1
    %v2008 = vadd.f32 %v2006, %v2007
    %v2009 = vsel %vm1358, %v1964, 0.0
    %v2010 = vrot.slane %v2009, 4
    %v2011 = vadd.f32 %v2009, %v2010
    %v2012 = vrot.slane %v2011, 2
    %v2013 = vadd.f32 %v2011, %v2012
    %v2014 = vrot.slane %v2013, 1
    %v2015 = vadd.f32 %v2013, %v2014
    %v2016 = vsel %vm1358, %v1966, 0.0
    %v2017 = vrot.slane %v2016, 4
    %v2018 = vadd.f32 %v2016, %v2017
    %v2019 = vrot.slane %v2018, 2
    %v2020 = vadd.f32 %v2018, %v2019
    %v2021 = vrot.slane %v2020, 1
    %v2022 = vadd.f32 %v2020, %v2021
    %v2023 = vsub.f32 %v1973, 1.0
    %v2024 = vsub.f32 %v1980, 1.0
    %v2025 = vsub.f32 %v1987, 1.0
    %v2026 = vsub.f32 %v1994, 1.0
    %v2027 = vsub.f32 %v2001, 1.0
    %v2028 = vsub.f32 %v2008, 1.0
    %v2029 = vsub.f32 %v2015, 1.0
    %v2030 = vsub.f32 %v2022, 1.0
    %v2031 = vld [vmem:[%s17] sm:$0x1]
    %v2033 = vperm.slane %v2031, 0
    %v2035 = vmul.f32 %v1433, %v2033
    %v2036 = vld [vmem:[%s18] sm:$0x1]
    %v2038 = vperm.slane %v2036, 0
    %v2040 = vmul.f32 %v2023, %v2038
    %v2041 = vmul.f32 %v2024, %v2038
    %v2042 = vmul.f32 %v2025, %v2038
    %v2043 = vmul.f32 %v2026, %v2038
    %v2044 = vmul.f32 %v2027, %v2038
    %v2045 = vmul.f32 %v2028, %v2038
    %v2046 = vmul.f32 %v2029, %v2038
    %v2047 = vmul.f32 %v2030, %v2038
    %v2056 = vrot.slane %v2041, 7
    %v2057 = vsel %vm1610, %v2056, %v2040
    %v2058 = vrot.slane %v2042, 6
    %v2059 = vsel %vm1606, %v2058, %v2057
    %v2060 = vrot.slane %v2043, 5
    %v2061 = vsel %vm1612, %v2060, %v2059
    %v2062 = vrot.slane %v2044, 4
    %v2063 = vsel %vm1618, %v2062, %v2061
    %v2064 = vrot.slane %v2045, 3
    %v2065 = vsel %vm1624, %v2064, %v2063
    %v2066 = vrot.slane %v2046, 2
    %v2067 = vsel %vm1630, %v2066, %v2065
    %v2068 = vrot.slane %v2047, 1
    %vm2069 = vcmask 1047559
    %v2070 = vsel %vm2069, %v2068, %v2067
    %v2072 = vadd.f32 %v2035, %v2070
    %v2073 = vsel %vm1358, %v2072, 0.0
    %2074 = vadd.xlane.f32.xlu0 %v2073
    %v2075 = vpop.xlane.xlu0 %2074
    %v2076 = vld [vmem:[#allocation2] sm:$0x1]
    %v2078 = vperm.slane %v2076, 0
    %v2080 = vadd.f32 %v2075, %v2078
    %vm2081 = vcmask 7168
    %2082 = vst.msk [vmem:[%s20] sm:$0xff] %vm2081, %v2080
    // Predicated region
    $region86: #{tpu_custom_call.1} parent=1 // pred_check
      _
    $region87: #{tpu_custom_call.1} parent=1 // pred_check_branch
      %2084 = sbr.rel (0) target = $region89
    $region88: #{tpu_custom_call.1} parent=1 // pred_region
      _
    $region89: #{tpu_custom_call.1} parent=1 // pred_fallthru
      _
    // Predicated region
    $region90: #{tpu_custom_call.1} parent=1 // pred_check
      _
    $region91: #{tpu_custom_call.1} parent=1 // pred_check_branch
      %2086 = sbr.rel (0) target = $region93
    $region92: #{tpu_custom_call.1} parent=1 // pred_region
      _
    $region93: #{tpu_custom_call.1} parent=1 // pred_fallthru
      _
    %2087 = vsyncpa [#allocation4], 1

</llo_original>
